<compile_context>
chip_gen: v6e
topology: v6e:2x2x1
jax: 0.10.0
libtpu: 0.0.40
codegen_flags: <defaults>
</compile_context>

<pallas_src>
import functools

import jax
import jax.numpy as jnp
import numpy as np
from jax import lax
from jax.experimental import pallas as pl
from jax.experimental.pallas import tpu as pltpu


def _round_up(n, m):
    return ((n + m - 1) // m) * m


def _pick_bblk(batch, max_blk=8):
    """Largest divisor of `batch` <= max_blk that still leaves >= 2 grid steps."""
    for cand in range(min(batch, max_blk), 0, -1):
        if batch % cand == 0 and batch // cand >= 2:
            return cand
    return 1


def _spatial_masks(H, W, K, PAD, LP, rows):
    """mask[kx, p] = 1 iff flattened position p (< H*W) has a valid column tap
    at horizontal offset kx for a K x K 'same' convolution."""
    HW = H * W
    m = np.zeros((rows, LP), np.float32)
    p = np.arange(LP)
    colp = p % W
    for kx in range(K):
        valid = (p < HW) & (colp + kx - PAD >= 0) & (colp + kx - PAD < W)
        m[kx] = valid.astype(np.float32)
    return m


# ----------------------------------------------------------------------------
# Fused CBAM kernel (one block of Bblk images per grid step).
#   x_ref    : (Bblk, C, HW) f32   input, lane-dense
#   w1_ref   : (Cr, C)       f32   fc1 weight (1x1 conv, no bias)
#   w2_ref   : (C, Cr)       f32   fc2 weight (1x1 conv, no bias)
#   mask_ref : (8, LP)       f32   per-kx column-validity masks (constant)
#   wsp_ref  : (2*K*K,)      f32   7x7 spatial conv weights, SMEM scalars
#   y_ref    : (Bblk, C, HW) f32   output, lane-dense
#   mean_scr : (Bpad, LP)    f32   VMEM scratch: per-image channel-mean rows
#   max_scr  : (Bpad, LP)    f32   VMEM scratch: per-image channel-max rows
# ----------------------------------------------------------------------------
def cbam_kernel(x_ref, w1_ref, w2_ref, mask_ref, wsp_ref, y_ref,
                mean_scr, max_scr,
                *, Bblk, Bpad, C, W, K, PAD, HW, LP):
    # ---- channel attention: pools for every image, one batched MLP ---------
    avg_cols, max_cols = [], []
    for b in range(Bblk):
        xb = x_ref[b]                                  # (C, HW) VMEM load
        avg_cols.append(jnp.mean(xb, axis=1, keepdims=True))   # (C, 1)
        max_cols.append(jnp.max(xb, axis=1, keepdims=True))    # (C, 1)

    # Stack [avg_b0 | max_b0 | avg_b1 | ...] into one (C, 2*Bblk) RHS so
    # fc1/fc2 each push through the MXU exactly once for the whole block.
    col = lax.broadcasted_iota(jnp.int32, (C, 2 * Bblk), 1)
    rhs = jnp.zeros((C, 2 * Bblk), jnp.float32)
    for b in range(Bblk):
        rhs = jnp.where(col == 2 * b, avg_cols[b], rhs)
        rhs = jnp.where(col == 2 * b + 1, max_cols[b], rhs)

    h = jnp.maximum(
        jnp.dot(w1_ref[...], rhs, preferred_element_type=jnp.float32), 0.0)
    z = jnp.dot(w2_ref[...], h, preferred_element_type=jnp.float32)  # (C, 2*Bblk)

    # ---- spatial stats (mean/max over channels), images stacked on sublanes
    # Zero only the pad/wrap tail (1 vreg per scratch); lanes [0, HW) of the
    # first Bblk rows are fully rewritten below every step.
    tail = jnp.zeros((Bpad, LP - HW), jnp.float32)
    mean_scr[:, HW:LP] = tail
    max_scr[:, HW:LP] = tail

    for b in range(Bblk):
        ca = jax.nn.sigmoid(z[:, 2 * b:2 * b + 1] + z[:, 2 * b + 1:2 * b + 2])
        xc = x_ref[b] * ca                             # (C, HW) channel-gated
        y_ref[b] = xc                                  # park xc in output VMEM
        mean_scr[b:b + 1, 0:HW] = jnp.mean(xc, axis=0, keepdims=True)
        max_scr[b:b + 1, 0:HW] = jnp.max(xc, axis=0, keepdims=True)

    # ---- 7x7 conv (2 -> 1 channel, "same" padding) in flattened layout ------
    # Tap (c, ky, kx) of output position p reads stat_c[p + (ky-PAD)*W + kx-PAD];
    # vertical zero padding is provided by the zero tail (wrap-around of the
    # roll lands in it), horizontal validity by the per-kx column mask.
    mean_all = mean_scr[...]                           # (Bpad, LP)
    max_all = max_scr[...]

    t_kx = [jnp.zeros_like(mean_all) for _ in range(K)]
    for ky in range(K):
        sh = ((PAD - ky) * W) % LP
        sm = mean_all if sh == 0 else pltpu.roll(mean_all, sh, axis=1)
        sx = max_all if sh == 0 else pltpu.roll(max_all, sh, axis=1)
        for kx in range(K):
            t_kx[kx] = (t_kx[kx]
                        + wsp_ref[ky * K + kx] * sm
                        + wsp_ref[K * K + ky * K + kx] * sx)

    conv = jnp.zeros_like(mean_all)
    for kx in range(K):
        sh = (PAD - kx) % LP
        part = t_kx[kx] if sh == 0 else pltpu.roll(t_kx[kx], sh, axis=1)
        conv = conv + mask_ref[kx:kx + 1, :] * part    # (1,LP) bcast over rows

    sg = jax.nn.sigmoid(conv[:, 0:HW])                 # (Bpad, HW) spatial gate

    # ---- apply spatial gate; full-width (C, HW) stores per image ------------
    for b in range(Bblk):
        y_ref[b] = y_ref[b] * sg[b:b + 1, :]


# ----------------------------------------------------------------------------
# Wrapper
# ----------------------------------------------------------------------------
def cbam_pallas(x, w1, w2, wsp, kernel_size=7, block_batch=None):
    B, C, H, W = x.shape
    HW = H * W
    Cr = w1.shape[0]
    K = kernel_size
    assert K in (3, 7), "kernel size must be 3 or 7"
    PAD = 3 if K == 7 else 1

    Bblk = block_batch if block_batch is not None else _pick_bblk(B)
    assert B % Bblk == 0, "batch must be divisible by the batch block"
    Bpad = max(8, _round_up(Bblk, 8))                # sublane-padded image rows
    LP = _round_up((H + 2 * PAD) * W, 128)           # padded flattened length

    xf = x.reshape(B, C, HW).astype(jnp.float32)     # lane-dense main layout
    wsp_flat = wsp.reshape(-1).astype(jnp.float32)   # 2*K*K scalars -> SMEM
    masks = jnp.asarray(_spatial_masks(H, W, K, PAD, LP, rows=8))

    kernel = functools.partial(cbam_kernel, Bblk=Bblk, Bpad=Bpad, C=C, W=W,
                               K=K, PAD=PAD, HW=HW, LP=LP)

    flops = int(B * (8 * C * Cr + 4 * K * K * HW + 8 * C * HW))
    transcendentals = int(B * (C + HW))
    bytes_accessed = int(4 * (2 * B * C * HW + 2 * C * Cr + 2 * K * K + 8 * LP))

    yf = pl.pallas_call(
        kernel,
        out_shape=jax.ShapeDtypeStruct((B, C, HW), jnp.float32),
        grid=(B // Bblk,),
        in_specs=[
            pl.BlockSpec((Bblk, C, HW), lambda i: (i, 0, 0)),
            pl.BlockSpec((Cr, C), lambda i: (0, 0)),
            pl.BlockSpec((C, Cr), lambda i: (0, 0)),
            pl.BlockSpec((8, LP), lambda i: (0, 0)),
            pl.BlockSpec(memory_space=pltpu.MemorySpace.SMEM),
        ],
        out_specs=pl.BlockSpec((Bblk, C, HW), lambda i: (i, 0, 0)),
        scratch_shapes=[
            pltpu.VMEM((Bpad, LP), jnp.float32),     # channel-mean rows (padded)
            pltpu.VMEM((Bpad, LP), jnp.float32),     # channel-max rows (padded)
        ],
        compiler_params=pltpu.CompilerParams(
            dimension_semantics=("parallel",)),
        cost_estimate=pl.CostEstimate(
            flops=flops, transcendentals=transcendentals,
            bytes_accessed=bytes_accessed),
    )(xf, w1.astype(jnp.float32), w2.astype(jnp.float32), masks, wsp_flat)
    return yf.reshape(B, C, H, W)


# ----------------------------------------------------------------------------
# Pure-JAX reference (mirrors the PyTorch forward exactly)
# ----------------------------------------------------------------------------
def cbam_ref(x, w1, w2, wsp, kernel_size=7):
    pad = 3 if kernel_size == 7 else 1
    avg = jnp.mean(x, axis=(2, 3))            # (B, C)
    mx = jnp.max(x, axis=(2, 3))              # (B, C)

    def mlp(v):
        h = jnp.maximum(v @ w1.T, 0.0)        # (B, C//r)
        return h @ w2.T                       # (B, C)

    ca = jax.nn.sigmoid(mlp(avg) + mlp(mx))[:, :, None, None]
    xc = x * ca

    avg_s = jnp.mean(xc, axis=1, keepdims=True)
    max_s = jnp.max(xc, axis=1, keepdims=True)
    st = jnp.concatenate([avg_s, max_s], axis=1)       # (B, 2, H, W)
    sa = lax.conv_general_dilated(
        st, wsp.reshape(1, 2, kernel_size, kernel_size), (1, 1),
        [(pad, pad), (pad, pad)],
        dimension_numbers=("NCHW", "OIHW", "NCHW"))
    sa = jax.nn.sigmoid(sa)
    return xc * sa


if __name__ == "__main__":
    B, C, H, W = 4, 16, 16, 16
    ratio, ksize = 8, 7

    key = jax.random.PRNGKey(0)
    k1, k2, k3, k4 = jax.random.split(key, 4)
    # Deterministic synthetic parameters (shapes from the PyTorch __init__):
    w1 = jax.random.normal(k1, (C // ratio, C), jnp.float32) * 0.1     # fc1
    w2 = jax.random.normal(k2, (C, C // ratio), jnp.float32) * 0.1     # fc2
    wsp = jax.random.normal(k3, (2, ksize, ksize), jnp.float32) * 0.1  # 7x7 conv
    x = jax.random.normal(k4, (B, C, H, W), jnp.float32)

    y = cbam_pallas(x, w1, w2, wsp, kernel_size=ksize)
    y = jax.block_until_ready(y)

    y_ref = cbam_ref(x, w1, w2, wsp, kernel_size=ksize)
    np.testing.assert_allclose(np.asarray(y), np.asarray(y_ref),
                               rtol=1e-4, atol=1e-4)
    print("KERNEL_OK")
</pallas_src>

<mosaic_0001>
module attributes {stable_mosaic.version = 11 : i64} {
  func.func @cbam_kernel(%arg0: i32, %arg1: memref<2x16x256xf32, #tpu.memory_space<vmem>>, %arg2: memref<2x16xf32, #tpu.memory_space<vmem>>, %arg3: memref<16x2xf32, #tpu.memory_space<vmem>>, %arg4: memref<8x384xf32, #tpu.memory_space<vmem>>, %arg5: memref<98xf32, #tpu.memory_space<smem>>, %arg6: memref<2x16x256xf32, #tpu.memory_space<vmem>>, %arg7: memref<8x384xf32, #tpu.memory_space<vmem>>, %arg8: memref<8x384xf32, #tpu.memory_space<vmem>>) attributes {dimension_semantics = [#tpu.dimension_semantics<parallel>], iteration_bounds = array<i64: 2>, scalar_prefetch = 0 : i64, scratch_operands = 2 : i64, tpu.core_type = #tpu.core_type<tc>, window_params = [{transform_indices = @transform_0, window_bounds = array<i64: 2, 16, 256>}, {pipeline_mode = #tpu.pipeline_mode<synchronous>, transform_indices = @transform_1, window_bounds = array<i64: 2, 16>}, {pipeline_mode = #tpu.pipeline_mode<synchronous>, transform_indices = @transform_2, window_bounds = array<i64: 16, 2>}, {pipeline_mode = #tpu.pipeline_mode<synchronous>, transform_indices = @transform_3, window_bounds = array<i64: 8, 384>}, {transform_indices = @transform_4, window_bounds = array<i64: 98>}, {transform_indices = @transform_5, window_bounds = array<i64: 2, 16, 256>}]} {
    %c0 = arith.constant 0 : index
    %c0_0 = arith.constant 0 : index
    %c0_1 = arith.constant 0 : index
    %0 = vector.load %arg1[%c0, %c0_0, %c0_1] : memref<2x16x256xf32, #tpu.memory_space<vmem>>, vector<1x16x256xf32>
    %1 = vector.shape_cast %0 : vector<1x16x256xf32> to vector<16x256xf32>
    %cst = arith.constant dense<0.000000e+00> : vector<16xf32>
    %2 = vector.multi_reduction <add>, %1, %cst [1] : vector<16x256xf32> to vector<16xf32>
    %3 = vector.shape_cast %2 : vector<16xf32> to vector<16x1xf32>
    %cst_2 = arith.constant 2.560000e+02 : f32
    %4 = vector.broadcast %cst_2 : f32 to vector<16x1xf32>
    %5 = arith.divf %3, %4 : vector<16x1xf32>
    %cst_3 = arith.constant dense<0xFF800000> : vector<16xf32>
    %6 = vector.multi_reduction <maximumf>, %1, %cst_3 [1] : vector<16x256xf32> to vector<16xf32>
    %7 = vector.shape_cast %6 : vector<16xf32> to vector<16x1xf32>
    %c1 = arith.constant 1 : index
    %c0_4 = arith.constant 0 : index
    %c0_5 = arith.constant 0 : index
    %8 = vector.load %arg1[%c1, %c0_4, %c0_5] : memref<2x16x256xf32, #tpu.memory_space<vmem>>, vector<1x16x256xf32>
    %9 = vector.shape_cast %8 : vector<1x16x256xf32> to vector<16x256xf32>
    %cst_6 = arith.constant dense<0.000000e+00> : vector<16xf32>
    %10 = vector.multi_reduction <add>, %9, %cst_6 [1] : vector<16x256xf32> to vector<16xf32>
    %11 = vector.shape_cast %10 : vector<16xf32> to vector<16x1xf32>
    %cst_7 = arith.constant 2.560000e+02 : f32
    %12 = vector.broadcast %cst_7 : f32 to vector<16x1xf32>
    %13 = arith.divf %11, %12 : vector<16x1xf32>
    %cst_8 = arith.constant dense<0xFF800000> : vector<16xf32>
    %14 = vector.multi_reduction <maximumf>, %9, %cst_8 [1] : vector<16x256xf32> to vector<16xf32>
    %15 = vector.shape_cast %14 : vector<16xf32> to vector<16x1xf32>
    %16 = tpu.iota {dimensions = array<i32: 1>} : vector<16x4xi32>
    %cst_9 = arith.constant 0.000000e+00 : f32
    %17 = vector.broadcast %cst_9 : f32 to vector<16x4xf32>
    %c0_i32 = arith.constant 0 : i32
    %18 = vector.broadcast %c0_i32 : i32 to vector<16x4xi32>
    %19 = arith.cmpi eq, %16, %18 : vector<16x4xi32>
    %20 = vector.shape_cast %5 : vector<16x1xf32> to vector<16x1xf32>
    %21 = vector.broadcast %20 : vector<16x1xf32> to vector<16x4xf32>
    %22 = arith.select %19, %21, %17 : vector<16x4xi1>, vector<16x4xf32>
    %c1_i32 = arith.constant 1 : i32
    %23 = vector.broadcast %c1_i32 : i32 to vector<16x4xi32>
    %24 = arith.cmpi eq, %16, %23 : vector<16x4xi32>
    %25 = vector.shape_cast %7 : vector<16x1xf32> to vector<16x1xf32>
    %26 = vector.broadcast %25 : vector<16x1xf32> to vector<16x4xf32>
    %27 = arith.select %24, %26, %22 : vector<16x4xi1>, vector<16x4xf32>
    %c2_i32 = arith.constant 2 : i32
    %28 = vector.broadcast %c2_i32 : i32 to vector<16x4xi32>
    %29 = arith.cmpi eq, %16, %28 : vector<16x4xi32>
    %30 = vector.shape_cast %13 : vector<16x1xf32> to vector<16x1xf32>
    %31 = vector.broadcast %30 : vector<16x1xf32> to vector<16x4xf32>
    %32 = arith.select %29, %31, %27 : vector<16x4xi1>, vector<16x4xf32>
    %c3_i32 = arith.constant 3 : i32
    %33 = vector.broadcast %c3_i32 : i32 to vector<16x4xi32>
    %34 = arith.cmpi eq, %16, %33 : vector<16x4xi32>
    %35 = vector.shape_cast %15 : vector<16x1xf32> to vector<16x1xf32>
    %36 = vector.broadcast %35 : vector<16x1xf32> to vector<16x4xf32>
    %37 = arith.select %34, %36, %32 : vector<16x4xi1>, vector<16x4xf32>
    %c0_10 = arith.constant 0 : index
    %c0_11 = arith.constant 0 : index
    %38 = vector.load %arg2[%c0_10, %c0_11] : memref<2x16xf32, #tpu.memory_space<vmem>>, vector<2x16xf32>
    %cst_12 = arith.constant dense<0.000000e+00> : vector<2x4xf32>
    %39 = tpu.matmul %38, %37, %cst_12 {dimension_numbers = #tpu.dot_dimension_numbers<[1], [0], [0], [1], [0, 0, 1, 1], [], []>} : vector<2x16xf32>, vector<16x4xf32>, vector<2x4xf32> -> vector<2x4xf32>
    %cst_13 = arith.constant 0.000000e+00 : f32
    %40 = vector.broadcast %cst_13 : f32 to vector<2x4xf32>
    %41 = arith.maximumf %39, %40 : vector<2x4xf32>
    %c0_14 = arith.constant 0 : index
    %c0_15 = arith.constant 0 : index
    %42 = vector.load %arg3[%c0_14, %c0_15] : memref<16x2xf32, #tpu.memory_space<vmem>>, vector<16x2xf32>
    %cst_16 = arith.constant dense<0.000000e+00> : vector<16x4xf32>
    %43 = tpu.matmul %42, %41, %cst_16 {dimension_numbers = #tpu.dot_dimension_numbers<[1], [0], [0], [1], [0, 0, 1, 1], [], []>} : vector<16x2xf32>, vector<2x4xf32>, vector<16x4xf32> -> vector<16x4xf32>
    %cst_17 = arith.constant 0.000000e+00 : f32
    %44 = vector.broadcast %cst_17 : f32 to vector<8x128xf32>
    %c0_18 = arith.constant 0 : index
    %c256 = arith.constant 256 : index
    %45 = vector.load %arg7[%c0_18, %c256] : memref<8x384xf32, #tpu.memory_space<vmem>>, vector<8x128xf32>
    tpu.vector_store %arg7[%c0_18, %c256], %44 {strides = array<i32>} : memref<8x384xf32, #tpu.memory_space<vmem>>, vector<8x128xf32>,
    %c0_19 = arith.constant 0 : index
    %c256_20 = arith.constant 256 : index
    %46 = vector.load %arg8[%c0_19, %c256_20] : memref<8x384xf32, #tpu.memory_space<vmem>>, vector<8x128xf32>
    tpu.vector_store %arg8[%c0_19, %c256_20], %44 {strides = array<i32>} : memref<8x384xf32, #tpu.memory_space<vmem>>, vector<8x128xf32>,
    %47 = vector.extract_strided_slice %43 {offsets = [0, 0], sizes = [16, 1], strides = [1, 1]} : vector<16x4xf32> to vector<16x1xf32>
    %48 = vector.extract_strided_slice %43 {offsets = [0, 1], sizes = [16, 1], strides = [1, 1]} : vector<16x4xf32> to vector<16x1xf32>
    %49 = arith.addf %47, %48 : vector<16x1xf32>
    %50 = arith.negf %49 : vector<16x1xf32>
    %51 = math.exp %50 : vector<16x1xf32>
    %cst_21 = arith.constant 1.000000e+00 : f32
    %52 = vector.broadcast %cst_21 : f32 to vector<16x1xf32>
    %53 = arith.addf %52, %51 : vector<16x1xf32>
    %54 = arith.divf %52, %53 : vector<16x1xf32>
    %c0_22 = arith.constant 0 : index
    %c0_23 = arith.constant 0 : index
    %c0_24 = arith.constant 0 : index
    %55 = vector.load %arg1[%c0_22, %c0_23, %c0_24] : memref<2x16x256xf32, #tpu.memory_space<vmem>>, vector<1x16x256xf32>
    %56 = vector.shape_cast %55 : vector<1x16x256xf32> to vector<16x256xf32>
    %57 = vector.broadcast %54 : vector<16x1xf32> to vector<16x256xf32>
    %58 = arith.mulf %56, %57 : vector<16x256xf32>
    %c0_25 = arith.constant 0 : index
    %c0_26 = arith.constant 0 : index
    %c0_27 = arith.constant 0 : index
    %59 = vector.load %arg6[%c0_25, %c0_26, %c0_27] : memref<2x16x256xf32, #tpu.memory_space<vmem>>, vector<1x16x256xf32>
    %60 = vector.shape_cast %59 : vector<1x16x256xf32> to vector<16x256xf32>
    %61 = vector.shape_cast %58 : vector<16x256xf32> to vector<1x16x256xf32>
    tpu.vector_store %arg6[%c0_25, %c0_26, %c0_27], %61 {strides = array<i32>} : memref<2x16x256xf32, #tpu.memory_space<vmem>>, vector<1x16x256xf32>,
    %cst_28 = arith.constant dense<0.000000e+00> : vector<256xf32>
    %62 = vector.multi_reduction <add>, %58, %cst_28 [0] : vector<16x256xf32> to vector<256xf32>
    %63 = vector.shape_cast %62 : vector<256xf32> to vector<1x256xf32>
    %cst_29 = arith.constant 1.600000e+01 : f32
    %64 = vector.broadcast %cst_29 : f32 to vector<1x256xf32>
    %65 = arith.divf %63, %64 : vector<1x256xf32>
    %c0_30 = arith.constant 0 : index
    %c0_31 = arith.constant 0 : index
    %66 = vector.load %arg7[%c0_30, %c0_31] : memref<8x384xf32, #tpu.memory_space<vmem>>, vector<1x256xf32>
    tpu.vector_store %arg7[%c0_30, %c0_31], %65 {strides = array<i32>} : memref<8x384xf32, #tpu.memory_space<vmem>>, vector<1x256xf32>,
    %cst_32 = arith.constant dense<0xFF800000> : vector<256xf32>
    %67 = vector.multi_reduction <maximumf>, %58, %cst_32 [0] : vector<16x256xf32> to vector<256xf32>
    %68 = vector.shape_cast %67 : vector<256xf32> to vector<1x256xf32>
    %c0_33 = arith.constant 0 : index
    %c0_34 = arith.constant 0 : index
    %69 = vector.load %arg8[%c0_33, %c0_34] : memref<8x384xf32, #tpu.memory_space<vmem>>, vector<1x256xf32>
    tpu.vector_store %arg8[%c0_33, %c0_34], %68 {strides = array<i32>} : memref<8x384xf32, #tpu.memory_space<vmem>>, vector<1x256xf32>,
    %70 = vector.extract_strided_slice %43 {offsets = [0, 2], sizes = [16, 1], strides = [1, 1]} : vector<16x4xf32> to vector<16x1xf32>
    %71 = vector.extract_strided_slice %43 {offsets = [0, 3], sizes = [16, 1], strides = [1, 1]} : vector<16x4xf32> to vector<16x1xf32>
    %72 = arith.addf %70, %71 : vector<16x1xf32>
    %73 = arith.negf %72 : vector<16x1xf32>
    %74 = math.exp %73 : vector<16x1xf32>
    %cst_35 = arith.constant 1.000000e+00 : f32
    %75 = vector.broadcast %cst_35 : f32 to vector<16x1xf32>
    %76 = arith.addf %75, %74 : vector<16x1xf32>
    %77 = arith.divf %75, %76 : vector<16x1xf32>
    %c1_36 = arith.constant 1 : index
    %c0_37 = arith.constant 0 : index
    %c0_38 = arith.constant 0 : index
    %78 = vector.load %arg1[%c1_36, %c0_37, %c0_38] : memref<2x16x256xf32, #tpu.memory_space<vmem>>, vector<1x16x256xf32>
    %79 = vector.shape_cast %78 : vector<1x16x256xf32> to vector<16x256xf32>
    %80 = vector.broadcast %77 : vector<16x1xf32> to vector<16x256xf32>
    %81 = arith.mulf %79, %80 : vector<16x256xf32>
    %c1_39 = arith.constant 1 : index
    %c0_40 = arith.constant 0 : index
    %c0_41 = arith.constant 0 : index
    %82 = vector.load %arg6[%c1_39, %c0_40, %c0_41] : memref<2x16x256xf32, #tpu.memory_space<vmem>>, vector<1x16x256xf32>
    %83 = vector.shape_cast %82 : vector<1x16x256xf32> to vector<16x256xf32>
    %84 = vector.shape_cast %81 : vector<16x256xf32> to vector<1x16x256xf32>
    tpu.vector_store %arg6[%c1_39, %c0_40, %c0_41], %84 {strides = array<i32>} : memref<2x16x256xf32, #tpu.memory_space<vmem>>, vector<1x16x256xf32>,
    %cst_42 = arith.constant dense<0.000000e+00> : vector<256xf32>
    %85 = vector.multi_reduction <add>, %81, %cst_42 [0] : vector<16x256xf32> to vector<256xf32>
    %86 = vector.shape_cast %85 : vector<256xf32> to vector<1x256xf32>
    %cst_43 = arith.constant 1.600000e+01 : f32
    %87 = vector.broadcast %cst_43 : f32 to vector<1x256xf32>
    %88 = arith.divf %86, %87 : vector<1x256xf32>
    %c1_44 = arith.constant 1 : index
    %c0_45 = arith.constant 0 : index
    %89 = vector.load %arg7[%c1_44, %c0_45] : memref<8x384xf32, #tpu.memory_space<vmem>>, vector<1x256xf32>
    tpu.vector_store %arg7[%c1_44, %c0_45], %88 {strides = array<i32>} : memref<8x384xf32, #tpu.memory_space<vmem>>, vector<1x256xf32>,
    %cst_46 = arith.constant dense<0xFF800000> : vector<256xf32>
    %90 = vector.multi_reduction <maximumf>, %81, %cst_46 [0] : vector<16x256xf32> to vector<256xf32>
    %91 = vector.shape_cast %90 : vector<256xf32> to vector<1x256xf32>
    %c1_47 = arith.constant 1 : index
    %c0_48 = arith.constant 0 : index
    %92 = vector.load %arg8[%c1_47, %c0_48] : memref<8x384xf32, #tpu.memory_space<vmem>>, vector<1x256xf32>
    tpu.vector_store %arg8[%c1_47, %c0_48], %91 {strides = array<i32>} : memref<8x384xf32, #tpu.memory_space<vmem>>, vector<1x256xf32>,
    %c0_49 = arith.constant 0 : index
    %c0_50 = arith.constant 0 : index
    %93 = vector.load %arg7[%c0_49, %c0_50] : memref<8x384xf32, #tpu.memory_space<vmem>>, vector<8x384xf32>
    %c0_51 = arith.constant 0 : index
    %c0_52 = arith.constant 0 : index
    %94 = vector.load %arg8[%c0_51, %c0_52] : memref<8x384xf32, #tpu.memory_space<vmem>>, vector<8x384xf32>
    %cst_53 = arith.constant 0.000000e+00 : f32
    %95 = vector.broadcast %cst_53 : f32 to vector<8x384xf32>
    %cst_54 = arith.constant 0.000000e+00 : f32
    %96 = vector.broadcast %cst_54 : f32 to vector<8x384xf32>
    %cst_55 = arith.constant 0.000000e+00 : f32
    %97 = vector.broadcast %cst_55 : f32 to vector<8x384xf32>
    %cst_56 = arith.constant 0.000000e+00 : f32
    %98 = vector.broadcast %cst_56 : f32 to vector<8x384xf32>
    %cst_57 = arith.constant 0.000000e+00 : f32
    %99 = vector.broadcast %cst_57 : f32 to vector<8x384xf32>
    %cst_58 = arith.constant 0.000000e+00 : f32
    %100 = vector.broadcast %cst_58 : f32 to vector<8x384xf32>
    %cst_59 = arith.constant 0.000000e+00 : f32
    %101 = vector.broadcast %cst_59 : f32 to vector<8x384xf32>
    %c48_i32 = arith.constant 48 : i32
    %102 = tpu.dynamic_rotate %93 by %c48_i32 dim 1 : vector<8x384xf32>, i32 -> vector<8x384xf32>
    %c48_i32_60 = arith.constant 48 : i32
    %103 = tpu.dynamic_rotate %94 by %c48_i32_60 dim 1 : vector<8x384xf32>, i32 -> vector<8x384xf32>
    %c0_61 = arith.constant 0 : index
    %104 = memref.load %arg5[%c0_61] : memref<98xf32, #tpu.memory_space<smem>>
    %105 = vector.broadcast %104 : f32 to vector<8x384xf32>
    %106 = arith.mulf %105, %102 : vector<8x384xf32>
    %107 = arith.addf %95, %106 : vector<8x384xf32>
    %c49 = arith.constant 49 : index
    %108 = memref.load %arg5[%c49] : memref<98xf32, #tpu.memory_space<smem>>
    %109 = vector.broadcast %108 : f32 to vector<8x384xf32>
    %110 = arith.mulf %109, %103 : vector<8x384xf32>
    %111 = arith.addf %107, %110 : vector<8x384xf32>
    %c1_62 = arith.constant 1 : index
    %112 = memref.load %arg5[%c1_62] : memref<98xf32, #tpu.memory_space<smem>>
    %113 = vector.broadcast %112 : f32 to vector<8x384xf32>
    %114 = arith.mulf %113, %102 : vector<8x384xf32>
    %115 = arith.addf %96, %114 : vector<8x384xf32>
    %c50 = arith.constant 50 : index
    %116 = memref.load %arg5[%c50] : memref<98xf32, #tpu.memory_space<smem>>
    %117 = vector.broadcast %116 : f32 to vector<8x384xf32>
    %118 = arith.mulf %117, %103 : vector<8x384xf32>
    %119 = arith.addf %115, %118 : vector<8x384xf32>
    %c2 = arith.constant 2 : index
    %120 = memref.load %arg5[%c2] : memref<98xf32, #tpu.memory_space<smem>>
    %121 = vector.broadcast %120 : f32 to vector<8x384xf32>
    %122 = arith.mulf %121, %102 : vector<8x384xf32>
    %123 = arith.addf %97, %122 : vector<8x384xf32>
    %c51 = arith.constant 51 : index
    %124 = memref.load %arg5[%c51] : memref<98xf32, #tpu.memory_space<smem>>
    %125 = vector.broadcast %124 : f32 to vector<8x384xf32>
    %126 = arith.mulf %125, %103 : vector<8x384xf32>
    %127 = arith.addf %123, %126 : vector<8x384xf32>
    %c3 = arith.constant 3 : index
    %128 = memref.load %arg5[%c3] : memref<98xf32, #tpu.memory_space<smem>>
    %129 = vector.broadcast %128 : f32 to vector<8x384xf32>
    %130 = arith.mulf %129, %102 : vector<8x384xf32>
    %131 = arith.addf %98, %130 : vector<8x384xf32>
    %c52 = arith.constant 52 : index
    %132 = memref.load %arg5[%c52] : memref<98xf32, #tpu.memory_space<smem>>
    %133 = vector.broadcast %132 : f32 to vector<8x384xf32>
    %134 = arith.mulf %133, %103 : vector<8x384xf32>
    %135 = arith.addf %131, %134 : vector<8x384xf32>
    %c4 = arith.constant 4 : index
    %136 = memref.load %arg5[%c4] : memref<98xf32, #tpu.memory_space<smem>>
    %137 = vector.broadcast %136 : f32 to vector<8x384xf32>
    %138 = arith.mulf %137, %102 : vector<8x384xf32>
    %139 = arith.addf %99, %138 : vector<8x384xf32>
    %c53 = arith.constant 53 : index
    %140 = memref.load %arg5[%c53] : memref<98xf32, #tpu.memory_space<smem>>
    %141 = vector.broadcast %140 : f32 to vector<8x384xf32>
    %142 = arith.mulf %141, %103 : vector<8x384xf32>
    %143 = arith.addf %139, %142 : vector<8x384xf32>
    %c5 = arith.constant 5 : index
    %144 = memref.load %arg5[%c5] : memref<98xf32, #tpu.memory_space<smem>>
    %145 = vector.broadcast %144 : f32 to vector<8x384xf32>
    %146 = arith.mulf %145, %102 : vector<8x384xf32>
    %147 = arith.addf %100, %146 : vector<8x384xf32>
    %c54 = arith.constant 54 : index
    %148 = memref.load %arg5[%c54] : memref<98xf32, #tpu.memory_space<smem>>
    %149 = vector.broadcast %148 : f32 to vector<8x384xf32>
    %150 = arith.mulf %149, %103 : vector<8x384xf32>
    %151 = arith.addf %147, %150 : vector<8x384xf32>
    %c6 = arith.constant 6 : index
    %152 = memref.load %arg5[%c6] : memref<98xf32, #tpu.memory_space<smem>>
    %153 = vector.broadcast %152 : f32 to vector<8x384xf32>
    %154 = arith.mulf %153, %102 : vector<8x384xf32>
    %155 = arith.addf %101, %154 : vector<8x384xf32>
    %c55 = arith.constant 55 : index
    %156 = memref.load %arg5[%c55] : memref<98xf32, #tpu.memory_space<smem>>
    %157 = vector.broadcast %156 : f32 to vector<8x384xf32>
    %158 = arith.mulf %157, %103 : vector<8x384xf32>
    %159 = arith.addf %155, %158 : vector<8x384xf32>
    %c32_i32 = arith.constant 32 : i32
    %160 = tpu.dynamic_rotate %93 by %c32_i32 dim 1 : vector<8x384xf32>, i32 -> vector<8x384xf32>
    %c32_i32_63 = arith.constant 32 : i32
    %161 = tpu.dynamic_rotate %94 by %c32_i32_63 dim 1 : vector<8x384xf32>, i32 -> vector<8x384xf32>
    %c7 = arith.constant 7 : index
    %162 = memref.load %arg5[%c7] : memref<98xf32, #tpu.memory_space<smem>>
    %163 = vector.broadcast %162 : f32 to vector<8x384xf32>
    %164 = arith.mulf %163, %160 : vector<8x384xf32>
    %165 = arith.addf %111, %164 : vector<8x384xf32>
    %c56 = arith.constant 56 : index
    %166 = memref.load %arg5[%c56] : memref<98xf32, #tpu.memory_space<smem>>
    %167 = vector.broadcast %166 : f32 to vector<8x384xf32>
    %168 = arith.mulf %167, %161 : vector<8x384xf32>
    %169 = arith.addf %165, %168 : vector<8x384xf32>
    %c8 = arith.constant 8 : index
    %170 = memref.load %arg5[%c8] : memref<98xf32, #tpu.memory_space<smem>>
    %171 = vector.broadcast %170 : f32 to vector<8x384xf32>
    %172 = arith.mulf %171, %160 : vector<8x384xf32>
    %173 = arith.addf %119, %172 : vector<8x384xf32>
    %c57 = arith.constant 57 : index
    %174 = memref.load %arg5[%c57] : memref<98xf32, #tpu.memory_space<smem>>
    %175 = vector.broadcast %174 : f32 to vector<8x384xf32>
    %176 = arith.mulf %175, %161 : vector<8x384xf32>
    %177 = arith.addf %173, %176 : vector<8x384xf32>
    %c9 = arith.constant 9 : index
    %178 = memref.load %arg5[%c9] : memref<98xf32, #tpu.memory_space<smem>>
    %179 = vector.broadcast %178 : f32 to vector<8x384xf32>
    %180 = arith.mulf %179, %160 : vector<8x384xf32>
    %181 = arith.addf %127, %180 : vector<8x384xf32>
    %c58 = arith.constant 58 : index
    %182 = memref.load %arg5[%c58] : memref<98xf32, #tpu.memory_space<smem>>
    %183 = vector.broadcast %182 : f32 to vector<8x384xf32>
    %184 = arith.mulf %183, %161 : vector<8x384xf32>
    %185 = arith.addf %181, %184 : vector<8x384xf32>
    %c10 = arith.constant 10 : index
    %186 = memref.load %arg5[%c10] : memref<98xf32, #tpu.memory_space<smem>>
    %187 = vector.broadcast %186 : f32 to vector<8x384xf32>
    %188 = arith.mulf %187, %160 : vector<8x384xf32>
    %189 = arith.addf %135, %188 : vector<8x384xf32>
    %c59 = arith.constant 59 : index
    %190 = memref.load %arg5[%c59] : memref<98xf32, #tpu.memory_space<smem>>
    %191 = vector.broadcast %190 : f32 to vector<8x384xf32>
    %192 = arith.mulf %191, %161 : vector<8x384xf32>
    %193 = arith.addf %189, %192 : vector<8x384xf32>
    %c11 = arith.constant 11 : index
    %194 = memref.load %arg5[%c11] : memref<98xf32, #tpu.memory_space<smem>>
    %195 = vector.broadcast %194 : f32 to vector<8x384xf32>
    %196 = arith.mulf %195, %160 : vector<8x384xf32>
    %197 = arith.addf %143, %196 : vector<8x384xf32>
    %c60 = arith.constant 60 : index
    %198 = memref.load %arg5[%c60] : memref<98xf32, #tpu.memory_space<smem>>
    %199 = vector.broadcast %198 : f32 to vector<8x384xf32>
    %200 = arith.mulf %199, %161 : vector<8x384xf32>
    %201 = arith.addf %197, %200 : vector<8x384xf32>
    %c12 = arith.constant 12 : index
    %202 = memref.load %arg5[%c12] : memref<98xf32, #tpu.memory_space<smem>>
    %203 = vector.broadcast %202 : f32 to vector<8x384xf32>
    %204 = arith.mulf %203, %160 : vector<8x384xf32>
    %205 = arith.addf %151, %204 : vector<8x384xf32>
    %c61 = arith.constant 61 : index
    %206 = memref.load %arg5[%c61] : memref<98xf32, #tpu.memory_space<smem>>
    %207 = vector.broadcast %206 : f32 to vector<8x384xf32>
    %208 = arith.mulf %207, %161 : vector<8x384xf32>
    %209 = arith.addf %205, %208 : vector<8x384xf32>
    %c13 = arith.constant 13 : index
    %210 = memref.load %arg5[%c13] : memref<98xf32, #tpu.memory_space<smem>>
    %211 = vector.broadcast %210 : f32 to vector<8x384xf32>
    %212 = arith.mulf %211, %160 : vector<8x384xf32>
    %213 = arith.addf %159, %212 : vector<8x384xf32>
    %c62 = arith.constant 62 : index
    %214 = memref.load %arg5[%c62] : memref<98xf32, #tpu.memory_space<smem>>
    %215 = vector.broadcast %214 : f32 to vector<8x384xf32>
    %216 = arith.mulf %215, %161 : vector<8x384xf32>
    %217 = arith.addf %213, %216 : vector<8x384xf32>
    %c16_i32 = arith.constant 16 : i32
    %218 = tpu.dynamic_rotate %93 by %c16_i32 dim 1 : vector<8x384xf32>, i32 -> vector<8x384xf32>
    %c16_i32_64 = arith.constant 16 : i32
    %219 = tpu.dynamic_rotate %94 by %c16_i32_64 dim 1 : vector<8x384xf32>, i32 -> vector<8x384xf32>
    %c14 = arith.constant 14 : index
    %220 = memref.load %arg5[%c14] : memref<98xf32, #tpu.memory_space<smem>>
    %221 = vector.broadcast %220 : f32 to vector<8x384xf32>
    %222 = arith.mulf %221, %218 : vector<8x384xf32>
    %223 = arith.addf %169, %222 : vector<8x384xf32>
    %c63 = arith.constant 63 : index
    %224 = memref.load %arg5[%c63] : memref<98xf32, #tpu.memory_space<smem>>
    %225 = vector.broadcast %224 : f32 to vector<8x384xf32>
    %226 = arith.mulf %225, %219 : vector<8x384xf32>
    %227 = arith.addf %223, %226 : vector<8x384xf32>
    %c15 = arith.constant 15 : index
    %228 = memref.load %arg5[%c15] : memref<98xf32, #tpu.memory_space<smem>>
    %229 = vector.broadcast %228 : f32 to vector<8x384xf32>
    %230 = arith.mulf %229, %218 : vector<8x384xf32>
    %231 = arith.addf %177, %230 : vector<8x384xf32>
    %c64 = arith.constant 64 : index
    %232 = memref.load %arg5[%c64] : memref<98xf32, #tpu.memory_space<smem>>
    %233 = vector.broadcast %232 : f32 to vector<8x384xf32>
    %234 = arith.mulf %233, %219 : vector<8x384xf32>
    %235 = arith.addf %231, %234 : vector<8x384xf32>
    %c16 = arith.constant 16 : index
    %236 = memref.load %arg5[%c16] : memref<98xf32, #tpu.memory_space<smem>>
    %237 = vector.broadcast %236 : f32 to vector<8x384xf32>
    %238 = arith.mulf %237, %218 : vector<8x384xf32>
    %239 = arith.addf %185, %238 : vector<8x384xf32>
    %c65 = arith.constant 65 : index
    %240 = memref.load %arg5[%c65] : memref<98xf32, #tpu.memory_space<smem>>
    %241 = vector.broadcast %240 : f32 to vector<8x384xf32>
    %242 = arith.mulf %241, %219 : vector<8x384xf32>
    %243 = arith.addf %239, %242 : vector<8x384xf32>
    %c17 = arith.constant 17 : index
    %244 = memref.load %arg5[%c17] : memref<98xf32, #tpu.memory_space<smem>>
    %245 = vector.broadcast %244 : f32 to vector<8x384xf32>
    %246 = arith.mulf %245, %218 : vector<8x384xf32>
    %247 = arith.addf %193, %246 : vector<8x384xf32>
    %c66 = arith.constant 66 : index
    %248 = memref.load %arg5[%c66] : memref<98xf32, #tpu.memory_space<smem>>
    %249 = vector.broadcast %248 : f32 to vector<8x384xf32>
    %250 = arith.mulf %249, %219 : vector<8x384xf32>
    %251 = arith.addf %247, %250 : vector<8x384xf32>
    %c18 = arith.constant 18 : index
    %252 = memref.load %arg5[%c18] : memref<98xf32, #tpu.memory_space<smem>>
    %253 = vector.broadcast %252 : f32 to vector<8x384xf32>
    %254 = arith.mulf %253, %218 : vector<8x384xf32>
    %255 = arith.addf %201, %254 : vector<8x384xf32>
    %c67 = arith.constant 67 : index
    %256 = memref.load %arg5[%c67] : memref<98xf32, #tpu.memory_space<smem>>
    %257 = vector.broadcast %256 : f32 to vector<8x384xf32>
    %258 = arith.mulf %257, %219 : vector<8x384xf32>
    %259 = arith.addf %255, %258 : vector<8x384xf32>
    %c19 = arith.constant 19 : index
    %260 = memref.load %arg5[%c19] : memref<98xf32, #tpu.memory_space<smem>>
    %261 = vector.broadcast %260 : f32 to vector<8x384xf32>
    %262 = arith.mulf %261, %218 : vector<8x384xf32>
    %263 = arith.addf %209, %262 : vector<8x384xf32>
    %c68 = arith.constant 68 : index
    %264 = memref.load %arg5[%c68] : memref<98xf32, #tpu.memory_space<smem>>
    %265 = vector.broadcast %264 : f32 to vector<8x384xf32>
    %266 = arith.mulf %265, %219 : vector<8x384xf32>
    %267 = arith.addf %263, %266 : vector<8x384xf32>
    %c20 = arith.constant 20 : index
    %268 = memref.load %arg5[%c20] : memref<98xf32, #tpu.memory_space<smem>>
    %269 = vector.broadcast %268 : f32 to vector<8x384xf32>
    %270 = arith.mulf %269, %218 : vector<8x384xf32>
    %271 = arith.addf %217, %270 : vector<8x384xf32>
    %c69 = arith.constant 69 : index
    %272 = memref.load %arg5[%c69] : memref<98xf32, #tpu.memory_space<smem>>
    %273 = vector.broadcast %272 : f32 to vector<8x384xf32>
    %274 = arith.mulf %273, %219 : vector<8x384xf32>
    %275 = arith.addf %271, %274 : vector<8x384xf32>
    %c21 = arith.constant 21 : index
    %276 = memref.load %arg5[%c21] : memref<98xf32, #tpu.memory_space<smem>>
    %277 = vector.broadcast %276 : f32 to vector<8x384xf32>
    %278 = arith.mulf %277, %93 : vector<8x384xf32>
    %279 = arith.addf %227, %278 : vector<8x384xf32>
    %c70 = arith.constant 70 : index
    %280 = memref.load %arg5[%c70] : memref<98xf32, #tpu.memory_space<smem>>
    %281 = vector.broadcast %280 : f32 to vector<8x384xf32>
    %282 = arith.mulf %281, %94 : vector<8x384xf32>
    %283 = arith.addf %279, %282 : vector<8x384xf32>
    %c22 = arith.constant 22 : index
    %284 = memref.load %arg5[%c22] : memref<98xf32, #tpu.memory_space<smem>>
    %285 = vector.broadcast %284 : f32 to vector<8x384xf32>
    %286 = arith.mulf %285, %93 : vector<8x384xf32>
    %287 = arith.addf %235, %286 : vector<8x384xf32>
    %c71 = arith.constant 71 : index
    %288 = memref.load %arg5[%c71] : memref<98xf32, #tpu.memory_space<smem>>
    %289 = vector.broadcast %288 : f32 to vector<8x384xf32>
    %290 = arith.mulf %289, %94 : vector<8x384xf32>
    %291 = arith.addf %287, %290 : vector<8x384xf32>
    %c23 = arith.constant 23 : index
    %292 = memref.load %arg5[%c23] : memref<98xf32, #tpu.memory_space<smem>>
    %293 = vector.broadcast %292 : f32 to vector<8x384xf32>
    %294 = arith.mulf %293, %93 : vector<8x384xf32>
    %295 = arith.addf %243, %294 : vector<8x384xf32>
    %c72 = arith.constant 72 : index
    %296 = memref.load %arg5[%c72] : memref<98xf32, #tpu.memory_space<smem>>
    %297 = vector.broadcast %296 : f32 to vector<8x384xf32>
    %298 = arith.mulf %297, %94 : vector<8x384xf32>
    %299 = arith.addf %295, %298 : vector<8x384xf32>
    %c24 = arith.constant 24 : index
    %300 = memref.load %arg5[%c24] : memref<98xf32, #tpu.memory_space<smem>>
    %301 = vector.broadcast %300 : f32 to vector<8x384xf32>
    %302 = arith.mulf %301, %93 : vector<8x384xf32>
    %303 = arith.addf %251, %302 : vector<8x384xf32>
    %c73 = arith.constant 73 : index
    %304 = memref.load %arg5[%c73] : memref<98xf32, #tpu.memory_space<smem>>
    %305 = vector.broadcast %304 : f32 to vector<8x384xf32>
    %306 = arith.mulf %305, %94 : vector<8x384xf32>
    %307 = arith.addf %303, %306 : vector<8x384xf32>
    %c25 = arith.constant 25 : index
    %308 = memref.load %arg5[%c25] : memref<98xf32, #tpu.memory_space<smem>>
    %309 = vector.broadcast %308 : f32 to vector<8x384xf32>
    %310 = arith.mulf %309, %93 : vector<8x384xf32>
    %311 = arith.addf %259, %310 : vector<8x384xf32>
    %c74 = arith.constant 74 : index
    %312 = memref.load %arg5[%c74] : memref<98xf32, #tpu.memory_space<smem>>
    %313 = vector.broadcast %312 : f32 to vector<8x384xf32>
    %314 = arith.mulf %313, %94 : vector<8x384xf32>
    %315 = arith.addf %311, %314 : vector<8x384xf32>
    %c26 = arith.constant 26 : index
    %316 = memref.load %arg5[%c26] : memref<98xf32, #tpu.memory_space<smem>>
    %317 = vector.broadcast %316 : f32 to vector<8x384xf32>
    %318 = arith.mulf %317, %93 : vector<8x384xf32>
    %319 = arith.addf %267, %318 : vector<8x384xf32>
    %c75 = arith.constant 75 : index
    %320 = memref.load %arg5[%c75] : memref<98xf32, #tpu.memory_space<smem>>
    %321 = vector.broadcast %320 : f32 to vector<8x384xf32>
    %322 = arith.mulf %321, %94 : vector<8x384xf32>
    %323 = arith.addf %319, %322 : vector<8x384xf32>
    %c27 = arith.constant 27 : index
    %324 = memref.load %arg5[%c27] : memref<98xf32, #tpu.memory_space<smem>>
    %325 = vector.broadcast %324 : f32 to vector<8x384xf32>
    %326 = arith.mulf %325, %93 : vector<8x384xf32>
    %327 = arith.addf %275, %326 : vector<8x384xf32>
    %c76 = arith.constant 76 : index
    %328 = memref.load %arg5[%c76] : memref<98xf32, #tpu.memory_space<smem>>
    %329 = vector.broadcast %328 : f32 to vector<8x384xf32>
    %330 = arith.mulf %329, %94 : vector<8x384xf32>
    %331 = arith.addf %327, %330 : vector<8x384xf32>
    %c368_i32 = arith.constant 368 : i32
    %332 = tpu.dynamic_rotate %93 by %c368_i32 dim 1 : vector<8x384xf32>, i32 -> vector<8x384xf32>
    %c368_i32_65 = arith.constant 368 : i32
    %333 = tpu.dynamic_rotate %94 by %c368_i32_65 dim 1 : vector<8x384xf32>, i32 -> vector<8x384xf32>
    %c28 = arith.constant 28 : index
    %334 = memref.load %arg5[%c28] : memref<98xf32, #tpu.memory_space<smem>>
    %335 = vector.broadcast %334 : f32 to vector<8x384xf32>
    %336 = arith.mulf %335, %332 : vector<8x384xf32>
    %337 = arith.addf %283, %336 : vector<8x384xf32>
    %c77 = arith.constant 77 : index
    %338 = memref.load %arg5[%c77] : memref<98xf32, #tpu.memory_space<smem>>
    %339 = vector.broadcast %338 : f32 to vector<8x384xf32>
    %340 = arith.mulf %339, %333 : vector<8x384xf32>
    %341 = arith.addf %337, %340 : vector<8x384xf32>
    %c29 = arith.constant 29 : index
    %342 = memref.load %arg5[%c29] : memref<98xf32, #tpu.memory_space<smem>>
    %343 = vector.broadcast %342 : f32 to vector<8x384xf32>
    %344 = arith.mulf %343, %332 : vector<8x384xf32>
    %345 = arith.addf %291, %344 : vector<8x384xf32>
    %c78 = arith.constant 78 : index
    %346 = memref.load %arg5[%c78] : memref<98xf32, #tpu.memory_space<smem>>
    %347 = vector.broadcast %346 : f32 to vector<8x384xf32>
    %348 = arith.mulf %347, %333 : vector<8x384xf32>
    %349 = arith.addf %345, %348 : vector<8x384xf32>
    %c30 = arith.constant 30 : index
    %350 = memref.load %arg5[%c30] : memref<98xf32, #tpu.memory_space<smem>>
    %351 = vector.broadcast %350 : f32 to vector<8x384xf32>
    %352 = arith.mulf %351, %332 : vector<8x384xf32>
    %353 = arith.addf %299, %352 : vector<8x384xf32>
    %c79 = arith.constant 79 : index
    %354 = memref.load %arg5[%c79] : memref<98xf32, #tpu.memory_space<smem>>
    %355 = vector.broadcast %354 : f32 to vector<8x384xf32>
    %356 = arith.mulf %355, %333 : vector<8x384xf32>
    %357 = arith.addf %353, %356 : vector<8x384xf32>
    %c31 = arith.constant 31 : index
    %358 = memref.load %arg5[%c31] : memref<98xf32, #tpu.memory_space<smem>>
    %359 = vector.broadcast %358 : f32 to vector<8x384xf32>
    %360 = arith.mulf %359, %332 : vector<8x384xf32>
    %361 = arith.addf %307, %360 : vector<8x384xf32>
    %c80 = arith.constant 80 : index
    %362 = memref.load %arg5[%c80] : memref<98xf32, #tpu.memory_space<smem>>
    %363 = vector.broadcast %362 : f32 to vector<8x384xf32>
    %364 = arith.mulf %363, %333 : vector<8x384xf32>
    %365 = arith.addf %361, %364 : vector<8x384xf32>
    %c32 = arith.constant 32 : index
    %366 = memref.load %arg5[%c32] : memref<98xf32, #tpu.memory_space<smem>>
    %367 = vector.broadcast %366 : f32 to vector<8x384xf32>
    %368 = arith.mulf %367, %332 : vector<8x384xf32>
    %369 = arith.addf %315, %368 : vector<8x384xf32>
    %c81 = arith.constant 81 : index
    %370 = memref.load %arg5[%c81] : memref<98xf32, #tpu.memory_space<smem>>
    %371 = vector.broadcast %370 : f32 to vector<8x384xf32>
    %372 = arith.mulf %371, %333 : vector<8x384xf32>
    %373 = arith.addf %369, %372 : vector<8x384xf32>
    %c33 = arith.constant 33 : index
    %374 = memref.load %arg5[%c33] : memref<98xf32, #tpu.memory_space<smem>>
    %375 = vector.broadcast %374 : f32 to vector<8x384xf32>
    %376 = arith.mulf %375, %332 : vector<8x384xf32>
    %377 = arith.addf %323, %376 : vector<8x384xf32>
    %c82 = arith.constant 82 : index
    %378 = memref.load %arg5[%c82] : memref<98xf32, #tpu.memory_space<smem>>
    %379 = vector.broadcast %378 : f32 to vector<8x384xf32>
    %380 = arith.mulf %379, %333 : vector<8x384xf32>
    %381 = arith.addf %377, %380 : vector<8x384xf32>
    %c34 = arith.constant 34 : index
    %382 = memref.load %arg5[%c34] : memref<98xf32, #tpu.memory_space<smem>>
    %383 = vector.broadcast %382 : f32 to vector<8x384xf32>
    %384 = arith.mulf %383, %332 : vector<8x384xf32>
    %385 = arith.addf %331, %384 : vector<8x384xf32>
    %c83 = arith.constant 83 : index
    %386 = memref.load %arg5[%c83] : memref<98xf32, #tpu.memory_space<smem>>
    %387 = vector.broadcast %386 : f32 to vector<8x384xf32>
    %388 = arith.mulf %387, %333 : vector<8x384xf32>
    %389 = arith.addf %385, %388 : vector<8x384xf32>
    %c352_i32 = arith.constant 352 : i32
    %390 = tpu.dynamic_rotate %93 by %c352_i32 dim 1 : vector<8x384xf32>, i32 -> vector<8x384xf32>
    %c352_i32_66 = arith.constant 352 : i32
    %391 = tpu.dynamic_rotate %94 by %c352_i32_66 dim 1 : vector<8x384xf32>, i32 -> vector<8x384xf32>
    %c35 = arith.constant 35 : index
    %392 = memref.load %arg5[%c35] : memref<98xf32, #tpu.memory_space<smem>>
    %393 = vector.broadcast %392 : f32 to vector<8x384xf32>
    %394 = arith.mulf %393, %390 : vector<8x384xf32>
    %395 = arith.addf %341, %394 : vector<8x384xf32>
    %c84 = arith.constant 84 : index
    %396 = memref.load %arg5[%c84] : memref<98xf32, #tpu.memory_space<smem>>
    %397 = vector.broadcast %396 : f32 to vector<8x384xf32>
    %398 = arith.mulf %397, %391 : vector<8x384xf32>
    %399 = arith.addf %395, %398 : vector<8x384xf32>
    %c36 = arith.constant 36 : index
    %400 = memref.load %arg5[%c36] : memref<98xf32, #tpu.memory_space<smem>>
    %401 = vector.broadcast %400 : f32 to vector<8x384xf32>
    %402 = arith.mulf %401, %390 : vector<8x384xf32>
    %403 = arith.addf %349, %402 : vector<8x384xf32>
    %c85 = arith.constant 85 : index
    %404 = memref.load %arg5[%c85] : memref<98xf32, #tpu.memory_space<smem>>
    %405 = vector.broadcast %404 : f32 to vector<8x384xf32>
    %406 = arith.mulf %405, %391 : vector<8x384xf32>
    %407 = arith.addf %403, %406 : vector<8x384xf32>
    %c37 = arith.constant 37 : index
    %408 = memref.load %arg5[%c37] : memref<98xf32, #tpu.memory_space<smem>>
    %409 = vector.broadcast %408 : f32 to vector<8x384xf32>
    %410 = arith.mulf %409, %390 : vector<8x384xf32>
    %411 = arith.addf %357, %410 : vector<8x384xf32>
    %c86 = arith.constant 86 : index
    %412 = memref.load %arg5[%c86] : memref<98xf32, #tpu.memory_space<smem>>
    %413 = vector.broadcast %412 : f32 to vector<8x384xf32>
    %414 = arith.mulf %413, %391 : vector<8x384xf32>
    %415 = arith.addf %411, %414 : vector<8x384xf32>
    %c38 = arith.constant 38 : index
    %416 = memref.load %arg5[%c38] : memref<98xf32, #tpu.memory_space<smem>>
    %417 = vector.broadcast %416 : f32 to vector<8x384xf32>
    %418 = arith.mulf %417, %390 : vector<8x384xf32>
    %419 = arith.addf %365, %418 : vector<8x384xf32>
    %c87 = arith.constant 87 : index
    %420 = memref.load %arg5[%c87] : memref<98xf32, #tpu.memory_space<smem>>
    %421 = vector.broadcast %420 : f32 to vector<8x384xf32>
    %422 = arith.mulf %421, %391 : vector<8x384xf32>
    %423 = arith.addf %419, %422 : vector<8x384xf32>
    %c39 = arith.constant 39 : index
    %424 = memref.load %arg5[%c39] : memref<98xf32, #tpu.memory_space<smem>>
    %425 = vector.broadcast %424 : f32 to vector<8x384xf32>
    %426 = arith.mulf %425, %390 : vector<8x384xf32>
    %427 = arith.addf %373, %426 : vector<8x384xf32>
    %c88 = arith.constant 88 : index
    %428 = memref.load %arg5[%c88] : memref<98xf32, #tpu.memory_space<smem>>
    %429 = vector.broadcast %428 : f32 to vector<8x384xf32>
    %430 = arith.mulf %429, %391 : vector<8x384xf32>
    %431 = arith.addf %427, %430 : vector<8x384xf32>
    %c40 = arith.constant 40 : index
    %432 = memref.load %arg5[%c40] : memref<98xf32, #tpu.memory_space<smem>>
    %433 = vector.broadcast %432 : f32 to vector<8x384xf32>
    %434 = arith.mulf %433, %390 : vector<8x384xf32>
    %435 = arith.addf %381, %434 : vector<8x384xf32>
    %c89 = arith.constant 89 : index
    %436 = memref.load %arg5[%c89] : memref<98xf32, #tpu.memory_space<smem>>
    %437 = vector.broadcast %436 : f32 to vector<8x384xf32>
    %438 = arith.mulf %437, %391 : vector<8x384xf32>
    %439 = arith.addf %435, %438 : vector<8x384xf32>
    %c41 = arith.constant 41 : index
    %440 = memref.load %arg5[%c41] : memref<98xf32, #tpu.memory_space<smem>>
    %441 = vector.broadcast %440 : f32 to vector<8x384xf32>
    %442 = arith.mulf %441, %390 : vector<8x384xf32>
    %443 = arith.addf %389, %442 : vector<8x384xf32>
    %c90 = arith.constant 90 : index
    %444 = memref.load %arg5[%c90] : memref<98xf32, #tpu.memory_space<smem>>
    %445 = vector.broadcast %444 : f32 to vector<8x384xf32>
    %446 = arith.mulf %445, %391 : vector<8x384xf32>
    %447 = arith.addf %443, %446 : vector<8x384xf32>
    %c336_i32 = arith.constant 336 : i32
    %448 = tpu.dynamic_rotate %93 by %c336_i32 dim 1 : vector<8x384xf32>, i32 -> vector<8x384xf32>
    %c336_i32_67 = arith.constant 336 : i32
    %449 = tpu.dynamic_rotate %94 by %c336_i32_67 dim 1 : vector<8x384xf32>, i32 -> vector<8x384xf32>
    %c42 = arith.constant 42 : index
    %450 = memref.load %arg5[%c42] : memref<98xf32, #tpu.memory_space<smem>>
    %451 = vector.broadcast %450 : f32 to vector<8x384xf32>
    %452 = arith.mulf %451, %448 : vector<8x384xf32>
    %453 = arith.addf %399, %452 : vector<8x384xf32>
    %c91 = arith.constant 91 : index
    %454 = memref.load %arg5[%c91] : memref<98xf32, #tpu.memory_space<smem>>
    %455 = vector.broadcast %454 : f32 to vector<8x384xf32>
    %456 = arith.mulf %455, %449 : vector<8x384xf32>
    %457 = arith.addf %453, %456 : vector<8x384xf32>
    %c43 = arith.constant 43 : index
    %458 = memref.load %arg5[%c43] : memref<98xf32, #tpu.memory_space<smem>>
    %459 = vector.broadcast %458 : f32 to vector<8x384xf32>
    %460 = arith.mulf %459, %448 : vector<8x384xf32>
    %461 = arith.addf %407, %460 : vector<8x384xf32>
    %c92 = arith.constant 92 : index
    %462 = memref.load %arg5[%c92] : memref<98xf32, #tpu.memory_space<smem>>
    %463 = vector.broadcast %462 : f32 to vector<8x384xf32>
    %464 = arith.mulf %463, %449 : vector<8x384xf32>
    %465 = arith.addf %461, %464 : vector<8x384xf32>
    %c44 = arith.constant 44 : index
    %466 = memref.load %arg5[%c44] : memref<98xf32, #tpu.memory_space<smem>>
    %467 = vector.broadcast %466 : f32 to vector<8x384xf32>
    %468 = arith.mulf %467, %448 : vector<8x384xf32>
    %469 = arith.addf %415, %468 : vector<8x384xf32>
    %c93 = arith.constant 93 : index
    %470 = memref.load %arg5[%c93] : memref<98xf32, #tpu.memory_space<smem>>
    %471 = vector.broadcast %470 : f32 to vector<8x384xf32>
    %472 = arith.mulf %471, %449 : vector<8x384xf32>
    %473 = arith.addf %469, %472 : vector<8x384xf32>
    %c45 = arith.constant 45 : index
    %474 = memref.load %arg5[%c45] : memref<98xf32, #tpu.memory_space<smem>>
    %475 = vector.broadcast %474 : f32 to vector<8x384xf32>
    %476 = arith.mulf %475, %448 : vector<8x384xf32>
    %477 = arith.addf %423, %476 : vector<8x384xf32>
    %c94 = arith.constant 94 : index
    %478 = memref.load %arg5[%c94] : memref<98xf32, #tpu.memory_space<smem>>
    %479 = vector.broadcast %478 : f32 to vector<8x384xf32>
    %480 = arith.mulf %479, %449 : vector<8x384xf32>
    %481 = arith.addf %477, %480 : vector<8x384xf32>
    %c46 = arith.constant 46 : index
    %482 = memref.load %arg5[%c46] : memref<98xf32, #tpu.memory_space<smem>>
    %483 = vector.broadcast %482 : f32 to vector<8x384xf32>
    %484 = arith.mulf %483, %448 : vector<8x384xf32>
    %485 = arith.addf %431, %484 : vector<8x384xf32>
    %c95 = arith.constant 95 : index
    %486 = memref.load %arg5[%c95] : memref<98xf32, #tpu.memory_space<smem>>
    %487 = vector.broadcast %486 : f32 to vector<8x384xf32>
    %488 = arith.mulf %487, %449 : vector<8x384xf32>
    %489 = arith.addf %485, %488 : vector<8x384xf32>
    %c47 = arith.constant 47 : index
    %490 = memref.load %arg5[%c47] : memref<98xf32, #tpu.memory_space<smem>>
    %491 = vector.broadcast %490 : f32 to vector<8x384xf32>
    %492 = arith.mulf %491, %448 : vector<8x384xf32>
    %493 = arith.addf %439, %492 : vector<8x384xf32>
    %c96 = arith.constant 96 : index
    %494 = memref.load %arg5[%c96] : memref<98xf32, #tpu.memory_space<smem>>
    %495 = vector.broadcast %494 : f32 to vector<8x384xf32>
    %496 = arith.mulf %495, %449 : vector<8x384xf32>
    %497 = arith.addf %493, %496 : vector<8x384xf32>
    %c48 = arith.constant 48 : index
    %498 = memref.load %arg5[%c48] : memref<98xf32, #tpu.memory_space<smem>>
    %499 = vector.broadcast %498 : f32 to vector<8x384xf32>
    %500 = arith.mulf %499, %448 : vector<8x384xf32>
    %501 = arith.addf %447, %500 : vector<8x384xf32>
    %c97 = arith.constant 97 : index
    %502 = memref.load %arg5[%c97] : memref<98xf32, #tpu.memory_space<smem>>
    %503 = vector.broadcast %502 : f32 to vector<8x384xf32>
    %504 = arith.mulf %503, %449 : vector<8x384xf32>
    %505 = arith.addf %501, %504 : vector<8x384xf32>
    %cst_68 = arith.constant 0.000000e+00 : f32
    %506 = vector.broadcast %cst_68 : f32 to vector<8x384xf32>
    %c3_i32_69 = arith.constant 3 : i32
    %507 = tpu.dynamic_rotate %457 by %c3_i32_69 dim 1 : vector<8x384xf32>, i32 -> vector<8x384xf32>
    %c0_70 = arith.constant 0 : index
    %c0_71 = arith.constant 0 : index
    %508 = vector.load %arg4[%c0_70, %c0_71] : memref<8x384xf32, #tpu.memory_space<vmem>>, vector<1x384xf32>
    %509 = vector.broadcast %508 : vector<1x384xf32> to vector<8x384xf32>
    %510 = arith.mulf %509, %507 : vector<8x384xf32>
    %511 = arith.addf %506, %510 : vector<8x384xf32>
    %c2_i32_72 = arith.constant 2 : i32
    %512 = tpu.dynamic_rotate %465 by %c2_i32_72 dim 1 : vector<8x384xf32>, i32 -> vector<8x384xf32>
    %c1_73 = arith.constant 1 : index
    %c0_74 = arith.constant 0 : index
    %513 = vector.load %arg4[%c1_73, %c0_74] : memref<8x384xf32, #tpu.memory_space<vmem>>, vector<1x384xf32>
    %514 = vector.broadcast %513 : vector<1x384xf32> to vector<8x384xf32>
    %515 = arith.mulf %514, %512 : vector<8x384xf32>
    %516 = arith.addf %511, %515 : vector<8x384xf32>
    %c1_i32_75 = arith.constant 1 : i32
    %517 = tpu.dynamic_rotate %473 by %c1_i32_75 dim 1 : vector<8x384xf32>, i32 -> vector<8x384xf32>
    %c2_76 = arith.constant 2 : index
    %c0_77 = arith.constant 0 : index
    %518 = vector.load %arg4[%c2_76, %c0_77] : memref<8x384xf32, #tpu.memory_space<vmem>>, vector<1x384xf32>
    %519 = vector.broadcast %518 : vector<1x384xf32> to vector<8x384xf32>
    %520 = arith.mulf %519, %517 : vector<8x384xf32>
    %521 = arith.addf %516, %520 : vector<8x384xf32>
    %c3_78 = arith.constant 3 : index
    %c0_79 = arith.constant 0 : index
    %522 = vector.load %arg4[%c3_78, %c0_79] : memref<8x384xf32, #tpu.memory_space<vmem>>, vector<1x384xf32>
    %523 = vector.broadcast %522 : vector<1x384xf32> to vector<8x384xf32>
    %524 = arith.mulf %523, %481 : vector<8x384xf32>
    %525 = arith.addf %521, %524 : vector<8x384xf32>
    %c383_i32 = arith.constant 383 : i32
    %526 = tpu.dynamic_rotate %489 by %c383_i32 dim 1 : vector<8x384xf32>, i32 -> vector<8x384xf32>
    %c4_80 = arith.constant 4 : index
    %c0_81 = arith.constant 0 : index
    %527 = vector.load %arg4[%c4_80, %c0_81] : memref<8x384xf32, #tpu.memory_space<vmem>>, vector<1x384xf32>
    %528 = vector.broadcast %527 : vector<1x384xf32> to vector<8x384xf32>
    %529 = arith.mulf %528, %526 : vector<8x384xf32>
    %530 = arith.addf %525, %529 : vector<8x384xf32>
    %c382_i32 = arith.constant 382 : i32
    %531 = tpu.dynamic_rotate %497 by %c382_i32 dim 1 : vector<8x384xf32>, i32 -> vector<8x384xf32>
    %c5_82 = arith.constant 5 : index
    %c0_83 = arith.constant 0 : index
    %532 = vector.load %arg4[%c5_82, %c0_83] : memref<8x384xf32, #tpu.memory_space<vmem>>, vector<1x384xf32>
    %533 = vector.broadcast %532 : vector<1x384xf32> to vector<8x384xf32>
    %534 = arith.mulf %533, %531 : vector<8x384xf32>
    %535 = arith.addf %530, %534 : vector<8x384xf32>
    %c381_i32 = arith.constant 381 : i32
    %536 = tpu.dynamic_rotate %505 by %c381_i32 dim 1 : vector<8x384xf32>, i32 -> vector<8x384xf32>
    %c6_84 = arith.constant 6 : index
    %c0_85 = arith.constant 0 : index
    %537 = vector.load %arg4[%c6_84, %c0_85] : memref<8x384xf32, #tpu.memory_space<vmem>>, vector<1x384xf32>
    %538 = vector.broadcast %537 : vector<1x384xf32> to vector<8x384xf32>
    %539 = arith.mulf %538, %536 : vector<8x384xf32>
    %540 = arith.addf %535, %539 : vector<8x384xf32>
    %541 = vector.extract_strided_slice %540 {offsets = [0, 0], sizes = [8, 256], strides = [1, 1]} : vector<8x384xf32> to vector<8x256xf32>
    %542 = arith.negf %541 : vector<8x256xf32>
    %543 = math.exp %542 : vector<8x256xf32>
    %cst_86 = arith.constant 1.000000e+00 : f32
    %544 = vector.broadcast %cst_86 : f32 to vector<8x256xf32>
    %545 = arith.addf %544, %543 : vector<8x256xf32>
    %546 = arith.divf %544, %545 : vector<8x256xf32>
    %c0_87 = arith.constant 0 : index
    %c0_88 = arith.constant 0 : index
    %c0_89 = arith.constant 0 : index
    %547 = vector.load %arg6[%c0_87, %c0_88, %c0_89] : memref<2x16x256xf32, #tpu.memory_space<vmem>>, vector<1x16x256xf32>
    %548 = vector.shape_cast %547 : vector<1x16x256xf32> to vector<16x256xf32>
    %549 = vector.extract_strided_slice %546 {offsets = [0, 0], sizes = [1, 256], strides = [1, 1]} : vector<8x256xf32> to vector<1x256xf32>
    %550 = vector.broadcast %549 : vector<1x256xf32> to vector<16x256xf32>
    %551 = arith.mulf %548, %550 : vector<16x256xf32>
    %c0_90 = arith.constant 0 : index
    %c0_91 = arith.constant 0 : index
    %c0_92 = arith.constant 0 : index
    %552 = vector.load %arg6[%c0_90, %c0_91, %c0_92] : memref<2x16x256xf32, #tpu.memory_space<vmem>>, vector<1x16x256xf32>
    %553 = vector.shape_cast %552 : vector<1x16x256xf32> to vector<16x256xf32>
    %554 = vector.shape_cast %551 : vector<16x256xf32> to vector<1x16x256xf32>
    tpu.vector_store %arg6[%c0_90, %c0_91, %c0_92], %554 {strides = array<i32>} : memref<2x16x256xf32, #tpu.memory_space<vmem>>, vector<1x16x256xf32>,
    %c1_93 = arith.constant 1 : index
    %c0_94 = arith.constant 0 : index
    %c0_95 = arith.constant 0 : index
    %555 = vector.load %arg6[%c1_93, %c0_94, %c0_95] : memref<2x16x256xf32, #tpu.memory_space<vmem>>, vector<1x16x256xf32>
    %556 = vector.shape_cast %555 : vector<1x16x256xf32> to vector<16x256xf32>
    %557 = vector.extract_strided_slice %546 {offsets = [1, 0], sizes = [1, 256], strides = [1, 1]} : vector<8x256xf32> to vector<1x256xf32>
    %558 = vector.broadcast %557 : vector<1x256xf32> to vector<16x256xf32>
    %559 = arith.mulf %556, %558 : vector<16x256xf32>
    %c1_96 = arith.constant 1 : index
    %c0_97 = arith.constant 0 : index
    %c0_98 = arith.constant 0 : index
    %560 = vector.load %arg6[%c1_96, %c0_97, %c0_98] : memref<2x16x256xf32, #tpu.memory_space<vmem>>, vector<1x16x256xf32>
    %561 = vector.shape_cast %560 : vector<1x16x256xf32> to vector<16x256xf32>
    %562 = vector.shape_cast %559 : vector<16x256xf32> to vector<1x16x256xf32>
    tpu.vector_store %arg6[%c1_96, %c0_97, %c0_98], %562 {strides = array<i32>} : memref<2x16x256xf32, #tpu.memory_space<vmem>>, vector<1x16x256xf32>,
    return
  }
  func.func @transform_0(%arg0: i32) -> (i32, i32, i32) {
    %c0_i32 = arith.constant 0 : i32
    %c0_i32_0 = arith.constant 0 : i32
    %c0_i32_1 = arith.constant 0 : i32
    return %arg0, %c0_i32, %c0_i32_0 : i32, i32, i32
  }
  func.func @transform_1(%arg0: i32) -> (i32, i32) {
    %c0_i32 = arith.constant 0 : i32
    %c0_i32_0 = arith.constant 0 : i32
    %c0_i32_1 = arith.constant 0 : i32
    return %c0_i32, %c0_i32_0 : i32, i32
  }
  func.func @transform_2(%arg0: i32) -> (i32, i32) {
    %c0_i32 = arith.constant 0 : i32
    %c0_i32_0 = arith.constant 0 : i32
    %c0_i32_1 = arith.constant 0 : i32
    return %c0_i32, %c0_i32_0 : i32, i32
  }
  func.func @transform_3(%arg0: i32) -> (i32, i32) {
    %c0_i32 = arith.constant 0 : i32
    %c0_i32_0 = arith.constant 0 : i32
    %c0_i32_1 = arith.constant 0 : i32
    return %c0_i32, %c0_i32_0 : i32, i32
  }
  func.func @transform_4(%arg0: i32) -> i32 {
    %c0_i32 = arith.constant 0 : i32
    %c0_i32_0 = arith.constant 0 : i32
    return %c0_i32 : i32
  }
  func.func @transform_5(%arg0: i32) -> (i32, i32, i32) {
    %c0_i32 = arith.constant 0 : i32
    %c0_i32_0 = arith.constant 0 : i32
    %c0_i32_1 = arith.constant 0 : i32
    return %arg0, %c0_i32, %c0_i32_0 : i32, i32, i32
  }
}

</mosaic_0001>

<llo_original>
// kernel: tpu_custom_call.1
$region0: #{tpu_custom_call.1}
  #allocation0 [shape = 'u32[]', space=smem, size = 0x4, offset = 0x4, fixed_abs, tag = 'smem constant byte address 0x4 - core index']
  #allocation1 [shape = 'u32[144,128]{1,0:T(1,128)}', space=vmem, size = 0x12000, scoped, tag = 'internal scratch']
  #allocation2 [shape = 'f32[8,384]{1,0:T(8,128)}', space=vmem, size = 0x3000, scoped, tag = 'scratch operand']
  #allocation3 [shape = 'f32[8,384]{1,0:T(8,128)}', space=vmem, size = 0x3000, scoped, tag = 'scratch operand']
  %s0 = inlined_call_operand.hbm [shape: f32[4,16,256], index: 0, kind: input, shape index: {}]
  %s1 = inlined_call_operand.vmem [shape: f32[2,16], index: 1, kind: input, shape index: {}]
  %s2 = inlined_call_operand.vmem [shape: f32[16,2], index: 2, kind: input, shape index: {}]
  %s3 = inlined_call_operand.hbm [shape: f32[8,384], index: 3, kind: input, shape index: {}]
  %s4 = inlined_call_operand.vmem [shape: f32[98], index: 4, kind: input, shape index: {}]
  %s5 = inlined_call_operand.hbm [shape: f32[4,16,256], index: 5, kind: output, shape index: {}]
  %s6 = sld [smem:[#allocation0]]
  $region65: #{tpu_custom_call.1} parent=0
    _
  %s8 = ssub.s32 1, %s6
  %s9 = scalar_select 0, %s8, %s6
  $region1: #{tpu_custom_call.1} parent=0
    #allocation4 [shape = 'u8[65536]{0}', space=vmem, size = 0x10000, scoped, tag = 'input window, operand 0']
    #allocation5 [shape = 's32[2]{0}', space=sflag, size = 0x8, scoped, tag = 'scoped memory for tpu_custom_call.1']
    #allocation6 [shape = 's32[2]{0}', space=sflag, size = 0x8, scoped, tag = 'scoped memory for tpu_custom_call.1']
    #allocation7 [shape = 's32[2]{0}', space=sflag, size = 0x8, scoped, tag = 'scoped memory for tpu_custom_call.1']
    #allocation8 [shape = 'u8[12288]{0}', space=vmem, size = 0x3000, scoped, tag = 'input window, operand 3, single buffered']
    #allocation9 [shape = 's32[1]{0}', space=sflag, size = 0x4, scoped, tag = 'scoped memory for tpu_custom_call.1']
    #allocation10 [shape = 'u8[512]{0}', space=smem, size = 0x200, scoped, tag = 'input window, operand 4, single buffered']
    #allocation11 [shape = 'u8[65536]{0}', space=vmem, size = 0x10000, scoped, tag = 'output window, operand 0']
    %10 = vsyncpa [#allocation5], 0
    %s11 = scalar_lea.sflag [#allocation5], 1
    %12 = vsyncpa %s11, 0
    %13 = vsyncpa [#allocation9], 0
    %14 = vsyncpa [#allocation7], 0
    %15 = vsyncpa [#allocation6], 0
    %s16 = scalar_lea.sflag [#allocation6], 1
    %17 = vsyncpa %s16, 0
    loop: start=0, step=1, limit=4
    $region2: #{tpu_custom_call.1} parent=1 // loop_pre_header
      _
    $region3: #{tpu_custom_call.1} parent=1 // loop_header
      %s19 = sphi 0, %s23
      %p20 = scmp.ge.s32.totalorder %s19, 4
      %s29 = sphi 0, %s31
      %s32 = sphi 0, %s29
      %s33 = sphi 0, %s32
      %s49 = sphi 0, %s33
      %s53 = sphi 0, %s53
      %s55 = sphi 0, %s53
      %s56 = sphi 0, %s55
      %s70 = sphi 0, %s56
      %s74 = sphi 0, %s74
      %s76 = sphi 0, %s74
      %s77 = sphi 0, %s76
      %s91 = sphi 0, %s77
      %s95 = sphi 0, %s95
      %s97 = sphi 0, %s95
      %s98 = sphi 0, %s97
      %s112 = sphi 0, %s98
      %s116 = sphi 0, %s116
      %s118 = sphi 0, %s116
      %s119 = sphi 0, %s118
      %s133 = sphi 0, %s119
      %s139 = sphi 0, %s141
      %s142 = sphi 0, %s139
      %s143 = sphi 0, %s142
      %s159 = sphi 0, %s143
    $region4: #{tpu_custom_call.1} parent=1 // loop_header_branch
      %22 = sbr.rel (%p20) target = $region8
    $region5: #{tpu_custom_call.1} parent=1 // loop_body
      %s24 = ssub.s32 %s19, 1
      %s25 = ssub.s32 %s19, 2
      %s26 = sadd.s32 %s19, 1
      %s27 = ssub.s32 %s19, %s26
      %p28 = scmp.eq.s32.totalorder %s27, 0
      %s30 = sadd.s32 %s29, 1
      %s31 = scalar_select %p28, %s29, %s30
      %p34 = pneg %p28
      %p35 = scmp.eq.s32.totalorder %s19, 1
      %p36 = por %p34, %p35
      %p37 = scmp.ne.s32.totalorder %s29, %s32
      %p38 = scmp.eq.s32.totalorder %s19, 0
      %p39 = por %p37, %p38
      %p40 = scmp.ne.s32.totalorder %s29, %s32
      %p41 = scmp.eq.s32.totalorder %s24, 1
      %p42 = por %p40, %p41
      %p43 = scmp.ne.s32.totalorder %s32, %s33
      %p44 = scmp.eq.s32.totalorder %s24, 0
      %p45 = por %p43, %p44
      %p46 = scmp.ne.s32.totalorder %s32, %s33
      %p47 = scmp.eq.s32.totalorder %s25, 1
      %p48 = por %p46, %p47
      %p50 = scmp.ne.s32.totalorder %s33, %s49
      %p51 = scmp.eq.s32.totalorder %s25, 0
      %p52 = por %p50, %p51
      %s54 = sadd.s32 %s53, 1
      %p57 = scmp.eq.s32.totalorder %s19, 1
      %p58 = scmp.ne.s32.totalorder %s53, %s55
      %p59 = scmp.eq.s32.totalorder %s19, 0
      %p60 = por %p58, %p59
      %p61 = scmp.ne.s32.totalorder %s53, %s55
      %p62 = scmp.eq.s32.totalorder %s24, 1
      %p63 = por %p61, %p62
      %p64 = scmp.ne.s32.totalorder %s55, %s56
      %p65 = scmp.eq.s32.totalorder %s24, 0
      %p66 = por %p64, %p65
      %p67 = scmp.ne.s32.totalorder %s55, %s56
      %p68 = scmp.eq.s32.totalorder %s25, 1
      %p69 = por %p67, %p68
      %p71 = scmp.ne.s32.totalorder %s56, %s70
      %p72 = scmp.eq.s32.totalorder %s25, 0
      %p73 = por %p71, %p72
      %s75 = sadd.s32 %s74, 1
      %p78 = scmp.eq.s32.totalorder %s19, 1
      %p79 = scmp.ne.s32.totalorder %s74, %s76
      %p80 = scmp.eq.s32.totalorder %s19, 0
      %p81 = por %p79, %p80
      %p82 = scmp.ne.s32.totalorder %s74, %s76
      %p83 = scmp.eq.s32.totalorder %s24, 1
      %p84 = por %p82, %p83
      %p85 = scmp.ne.s32.totalorder %s76, %s77
      %p86 = scmp.eq.s32.totalorder %s24, 0
      %p87 = por %p85, %p86
      %p88 = scmp.ne.s32.totalorder %s76, %s77
      %p89 = scmp.eq.s32.totalorder %s25, 1
      %p90 = por %p88, %p89
      %p92 = scmp.ne.s32.totalorder %s77, %s91
      %p93 = scmp.eq.s32.totalorder %s25, 0
      %p94 = por %p92, %p93
      %s96 = sadd.s32 %s95, 1
      %p99 = scmp.eq.s32.totalorder %s19, 1
      %p100 = scmp.ne.s32.totalorder %s95, %s97
      %p101 = scmp.eq.s32.totalorder %s19, 0
      %p102 = por %p100, %p101
      %p103 = scmp.ne.s32.totalorder %s95, %s97
      %p104 = scmp.eq.s32.totalorder %s24, 1
      %p105 = por %p103, %p104
      %p106 = scmp.ne.s32.totalorder %s97, %s98
      %p107 = scmp.eq.s32.totalorder %s24, 0
      %p108 = por %p106, %p107
      %p109 = scmp.ne.s32.totalorder %s97, %s98
      %p110 = scmp.eq.s32.totalorder %s25, 1
      %p111 = por %p109, %p110
      %p113 = scmp.ne.s32.totalorder %s98, %s112
      %p114 = scmp.eq.s32.totalorder %s25, 0
      %p115 = por %p113, %p114
      %s117 = sadd.s32 %s116, 1
      %p120 = scmp.eq.s32.totalorder %s19, 1
      %p121 = scmp.ne.s32.totalorder %s116, %s118
      %p122 = scmp.eq.s32.totalorder %s19, 0
      %p123 = por %p121, %p122
      %p124 = scmp.ne.s32.totalorder %s116, %s118
      %p125 = scmp.eq.s32.totalorder %s24, 1
      %p126 = por %p124, %p125
      %p127 = scmp.ne.s32.totalorder %s118, %s119
      %p128 = scmp.eq.s32.totalorder %s24, 0
      %p129 = por %p127, %p128
      %p130 = scmp.ne.s32.totalorder %s118, %s119
      %p131 = scmp.eq.s32.totalorder %s25, 1
      %p132 = por %p130, %p131
      %p134 = scmp.ne.s32.totalorder %s119, %s133
      %p135 = scmp.eq.s32.totalorder %s25, 0
      %p136 = por %p134, %p135
      %s137 = ssub.s32 %s19, %s26
      %p138 = scmp.eq.s32.totalorder %s137, 0
      %s140 = sadd.s32 %s139, 1
      %s141 = scalar_select %p138, %s139, %s140
      %p144 = pneg %p138
      %p145 = scmp.eq.s32.totalorder %s19, 1
      %p146 = por %p144, %p145
      %p147 = scmp.ne.s32.totalorder %s139, %s142
      %p148 = scmp.eq.s32.totalorder %s19, 0
      %p149 = por %p147, %p148
      %p150 = scmp.ne.s32.totalorder %s139, %s142
      %p151 = scmp.eq.s32.totalorder %s24, 1
      %p152 = por %p150, %p151
      %p153 = scmp.ne.s32.totalorder %s142, %s143
      %p154 = scmp.eq.s32.totalorder %s24, 0
      %p155 = por %p153, %p154
      %p156 = scmp.ne.s32.totalorder %s142, %s143
      %p157 = scmp.eq.s32.totalorder %s25, 1
      %p158 = por %p156, %p157
      %p160 = scmp.ne.s32.totalorder %s143, %s159
      %p161 = scmp.eq.s32.totalorder %s25, 0
      %p162 = por %p160, %p161
      %p163 = scmp.le.s32.totalorder 1, %s19
      %p164 = scmp.lt.s32.totalorder %s19, 3
      %p165 = pnand %p163, %p164
      %p166 = pneg %p165
      // Predicated region
      $region9: #{tpu_custom_call.1} parent=5 // pred_check
        _
      $region10: #{tpu_custom_call.1} parent=5 // pred_check_branch
        %168 = sbr.rel (%p165) target = $region12
      $region11: #{tpu_custom_call.1} parent=5 // pred_region
        %s169 = ssub.s32 %s19, 1
        // Predicated region
        $region13: #{tpu_custom_call.1} parent=11 // pred_check
          %p170 = pneg %p66
        $region14: #{tpu_custom_call.1} parent=11 // pred_check_branch
          %172 = sbr.rel (%p170) target = $region16
        $region15: #{tpu_custom_call.1} parent=11 // pred_region
          _
        $region16: #{tpu_custom_call.1} parent=11 // pred_fallthru
          _
        // Predicated region
        $region17: #{tpu_custom_call.1} parent=11 // pred_check
          %p173 = pneg %p87
        $region18: #{tpu_custom_call.1} parent=11 // pred_check_branch
          %175 = sbr.rel (%p173) target = $region20
        $region19: #{tpu_custom_call.1} parent=11 // pred_region
          _
        $region20: #{tpu_custom_call.1} parent=11 // pred_fallthru
          _
        // Predicated region
        $region21: #{tpu_custom_call.1} parent=11 // pred_check
          %p176 = pneg %p108
        $region22: #{tpu_custom_call.1} parent=11 // pred_check_branch
          %178 = sbr.rel (%p176) target = $region24
        $region23: #{tpu_custom_call.1} parent=11 // pred_region
          %s180 = ssub.s32 384, 384
          %181 = vsyncadd [#allocation9], %s180
          %s183 = sshll.u32 [#allocation8], 4
          %s184 = int_to_ptr.vmem [resolvable:$true] %s183
          %186 = dma.hbm_to_vmem [thread:$0]  %s3, 384, %s184, [#allocation9]
        $region24: #{tpu_custom_call.1} parent=11 // pred_fallthru
          _
        // Predicated region
        $region25: #{tpu_custom_call.1} parent=11 // pred_check
          %p187 = pneg %p129
        $region26: #{tpu_custom_call.1} parent=11 // pred_check_branch
          %189 = sbr.rel (%p187) target = $region28
        $region27: #{tpu_custom_call.1} parent=11 // pred_region
          %s191 = ssub.s32 16, 16
          %192 = vsyncadd [#allocation7], %s191
          %s194 = sshll.u32 %s4, 4
          %s195 = int_to_ptr.vmem [resolvable:$true] %s194
          %197 = dma.vmem_to_smem %s195, 16, [#allocation10], [#allocation7]
        $region28: #{tpu_custom_call.1} parent=11 // pred_fallthru
          _
      $region12: #{tpu_custom_call.1} parent=5 // pred_fallthru
        _
      %p198 = scmp.lt.s32.totalorder %s19, 2
      // Predicated region
      $region29: #{tpu_custom_call.1} parent=5 // pred_check
        %p199 = pneg %p198
      $region30: #{tpu_custom_call.1} parent=5 // pred_check_branch
        %201 = sbr.rel (%p199) target = $region32
      $region31: #{tpu_custom_call.1} parent=5 // pred_region
        // Predicated region
        $region33: #{tpu_custom_call.1} parent=31 // pred_check
          %p202 = pneg %p39
        $region34: #{tpu_custom_call.1} parent=31 // pred_check_branch
          %204 = sbr.rel (%p202) target = $region36
        $region35: #{tpu_custom_call.1} parent=31 // pred_region
          %s205 = sand.u32 %s29, 1
          %s206 = scalar_lea.sflag [#allocation5], %s205
          %s207 = sand.u32 %s29, 1
          %s208 = smul.addr %s207, 64
          %s209 = scalar_lea.vmem [#allocation4], %s208
          %s210 = smul.u32 2, %s19
          %s212 = ssub.s32 1024, 1024
          %213 = vsyncadd %s206, %s212
          %s214 = smul.addr %s210, 4
          %s215 = smul.addr %s214, 128
          %s216 = scalar_lea.hbm %s0, %s215
          %s217 = sshll.u32 %s209, 4
          %s218 = int_to_ptr.vmem [resolvable:$true] %s217
          %223 = dma.hbm_to_vmem [thread:$0]  %s216, 1024, %s218, %s206, 256, 256, 16
        $region36: #{tpu_custom_call.1} parent=31 // pred_fallthru
          _
      $region32: #{tpu_custom_call.1} parent=5 // pred_fallthru
        _
      %p224 = scmp.le.s32.totalorder 1, %s19
      %p225 = scmp.lt.s32.totalorder %s19, 3
      %p226 = pnand %p224, %p225
      %p227 = pneg %p226
      // Predicated region
      $region37: #{tpu_custom_call.1} parent=5 // pred_check
        _
      $region38: #{tpu_custom_call.1} parent=5 // pred_check_branch
        %229 = sbr.rel (%p226) target = $region40
      $region39: #{tpu_custom_call.1} parent=5 // pred_region
        %s230 = ssub.s32 %s19, 1
        %s231 = sand.u32 %s32, 1
        %s232 = scalar_lea.sflag [#allocation5], %s231
        %s233 = sand.u32 %s32, 1
        %s234 = smul.addr %s233, 64
        %s235 = scalar_lea.vmem [#allocation4], %s234
        // Predicated region
        $region41: #{tpu_custom_call.1} parent=39 // pred_check
          %p236 = pneg %p45
        $region42: #{tpu_custom_call.1} parent=39 // pred_check_branch
          %238 = sbr.rel (%p236) target = $region44
        $region43: #{tpu_custom_call.1} parent=39 // pred_region
          %239 = dma.done %s232, 1024
        $region44: #{tpu_custom_call.1} parent=39 // pred_fallthru
          _
        // Predicated region
        $region45: #{tpu_custom_call.1} parent=39 // pred_check
          %p240 = pneg %p108
        $region46: #{tpu_custom_call.1} parent=39 // pred_check_branch
          %242 = sbr.rel (%p240) target = $region48
        $region47: #{tpu_custom_call.1} parent=39 // pred_region
          %243 = dma.done [#allocation9], 384
        $region48: #{tpu_custom_call.1} parent=39 // pred_fallthru
          _
        // Predicated region
        $region49: #{tpu_custom_call.1} parent=39 // pred_check
          %p244 = pneg %p129
        $region50: #{tpu_custom_call.1} parent=39 // pred_check_branch
          %246 = sbr.rel (%p244) target = $region52
        $region51: #{tpu_custom_call.1} parent=39 // pred_region
          %247 = dma.done [#allocation7], 16
        $region52: #{tpu_custom_call.1} parent=39 // pred_fallthru
          _
        %248 = sfence
        %s249 = sand.u32 %s32, 1
        %s250 = scalar_lea.sflag [#allocation5], %s249
        %s251 = sand.u32 %s32, 1
        %s252 = smul.addr %s251, 64
        %s253 = scalar_lea.vmem [#allocation4], %s252
        %p254 = pneg %p45
        %p255 = pneg %p42
        %p256 = pneg %p66
        %p257 = pneg %p63
        %p258 = pneg %p87
        %p259 = pneg %p84
        %p260 = pneg %p108
        %p261 = pneg %p105
        %p262 = pneg %p129
        %p263 = pneg %p126
        %p264 = pneg %p155
        %p265 = pneg %p152
        %s266 = sand.u32 %s142, 1
        %s267 = scalar_lea.sflag [#allocation6], %s266
        %s268 = sand.u32 %s142, 1
        %s269 = smul.addr %s268, 64
        %s270 = scalar_lea.vmem [#allocation11], %s269
        %s271 = smul.u32 2, %s24
        %s272 = smul.u32 2, %s24
        %v273 = vld [vmem:[%s235] sm:$0xff]
        %v274 = vld [vmem:[%s235 + $0x8] sm:$0xff]
        %v275 = vld [vmem:[%s235 + $0x10] sm:$0xff]
        %v276 = vld [vmem:[%s235 + $0x18] sm:$0xff]
        %v277 = vadd.f32 %v273, %v274
        %278 = vadd.xlane.f32.xlu0 %v277
        %v279 = vpop.xlane.xlu0 %278
        %v280 = vadd.f32 %v275, %v276
        %281 = vadd.xlane.f32.xlu0 %v280
        %v282 = vpop.xlane.xlu0 %281
        %v283 = vrcp.pop 256.0
        %v284 = vmul.f32 %v279, %v283
        %v285 = vmul.f32 %v282, %v283
        %v286 = vmax.f32 %v273, %v274
        %287 = vmax.xlane.f32.xlu0 %v286
        %v288 = vpop.xlane.xlu0 %287
        %v289 = vmax.f32 %v275, %v276
        %290 = vmax.xlane.f32.xlu0 %v289
        %v291 = vpop.xlane.xlu0 %290
        %s292 = scalar_lea.vmem %s235, 32 [#allocation4]
        %v293 = vld [vmem:[%s292] sm:$0xff]
        %v294 = vld [vmem:[%s292 + $0x8] sm:$0xff]
        %v295 = vld [vmem:[%s292 + $0x10] sm:$0xff]
        %v296 = vld [vmem:[%s292 + $0x18] sm:$0xff]
        %v297 = vadd.f32 %v293, %v294
        %298 = vadd.xlane.f32.xlu0 %v297
        %v299 = vpop.xlane.xlu0 %298
        %v300 = vadd.f32 %v295, %v296
        %301 = vadd.xlane.f32.xlu0 %v300
        %v302 = vpop.xlane.xlu0 %301
        %v303 = vmul.f32 %v299, %v283
        %v304 = vmul.f32 %v302, %v283
        %v305 = vmax.f32 %v293, %v294
        %306 = vmax.xlane.f32.xlu0 %v305
        %v307 = vpop.xlane.xlu0 %306
        %v308 = vmax.f32 %v295, %v296
        %309 = vmax.xlane.f32.xlu0 %v308
        %v310 = vpop.xlane.xlu0 %309
        %v311 = vlaneseq
        %v312 = vand.u32 %v311, 127
        %vm313 = vcmp.eq.s32.totalorder %v312, 0
        %v314 = vsel %vm313, %v284, 0.0
        %v315 = vsel %vm313, %v285, 0.0
        %vm316 = vcmp.eq.s32.totalorder %v312, 1
        %v317 = vsel %vm316, %v288, %v314
        %v318 = vsel %vm316, %v291, %v315
        %vm319 = vcmp.eq.s32.totalorder %v312, 2
        %v320 = vsel %vm319, %v303, %v317
        %v321 = vsel %vm319, %v304, %v318
        %vm322 = vcmp.eq.s32.totalorder %v312, 3
        %v323 = vsel %vm322, %v307, %v320
        %v324 = vsel %vm322, %v310, %v321
        %v325 = vld [vmem:[%s1] sm:$0x3]
        %vm326 = vcmask 130048
        %v328 = vsel %vm326, %v325, 0
        %330 = vmatprep.subr.mxu0 0.0
        %331 = vmatpush1.msra.mxu0 0.0
        %332 = vmatprep.subr.mxu0 0.0
        %333 = vmatpush1.msra.mxu0 0.0
        %334 = vmatprep.subr.mxu0 0.0
        %335 = vmatpush1.msra.mxu0 0.0
        %336 = vmatprep.subr.mxu0 0.0
        %337 = vmatpush1.msra.mxu0 0.0
        %338 = vmatprep.subr.mxu0 0.0
        %339 = vmatpush1.msra.mxu0 0.0
        %340 = vmatprep.subr.mxu0 0.0
        %341 = vmatpush1.msra.mxu0 0.0
        %342 = vmatprep.subr.mxu0 0.0
        %343 = vmatpush1.msra.mxu0 0.0
        %344 = vmatprep.subr.mxu0 0.0
        %345 = vmatpush1.msra.mxu0 0.0
        %346 = vmatprep.subr.mxu0 0.0
        %347 = vmatpush1.msra.mxu0 0.0
        %348 = vmatprep.subr.mxu0 0.0
        %349 = vmatpush1.msra.mxu0 0.0
        %350 = vmatprep.subr.mxu0 0.0
        %351 = vmatpush1.msra.mxu0 0.0
        %352 = vmatprep.subr.mxu0 0.0
        %353 = vmatpush1.msra.mxu0 0.0
        %354 = vmatprep.subr.mxu0 0.0
        %355 = vmatpush1.msra.mxu0 0.0
        %356 = vmatprep.subr.mxu0 0.0
        %357 = vmatpush1.msra.mxu0 0.0
        %358 = vmatprep.subr.mxu0 0.0
        %359 = vmatpush1.msra.mxu0 %v324
        %360 = vmatprep.subr.mxu0 0.0
        %361 = vmatpush1.msra.mxu0 %v323
        %362 = vmatprep.subr.mxu0 0.0
        %363 = vmatpush2.msra.mxu0 0.0
        %364 = vmatprep.subr.mxu0 0.0
        %365 = vmatpush2.msra.mxu0 0.0
        %366 = vmatprep.subr.mxu0 0.0
        %367 = vmatpush2.msra.mxu0 0.0
        %368 = vmatprep.subr.mxu0 0.0
        %369 = vmatpush2.msra.mxu0 0.0
        %370 = vmatprep.subr.mxu0 0.0
        %371 = vmatpush2.msra.mxu0 0.0
        %372 = vmatprep.subr.mxu0 0.0
        %373 = vmatpush2.msra.mxu0 0.0
        %374 = vmatprep.subr.mxu0 0.0
        %375 = vmatpush2.msra.mxu0 0.0
        %376 = vmatprep.subr.mxu0 0.0
        %377 = vmatpush2.msra.mxu0 0.0
        %378 = vmatprep.subr.mxu0 0.0
        %379 = vmatpush2.msra.mxu0 0.0
        %380 = vmatprep.subr.mxu0 0.0
        %381 = vmatpush2.msra.mxu0 0.0
        %382 = vmatprep.subr.mxu0 0.0
        %383 = vmatpush2.msra.mxu0 0.0
        %384 = vmatprep.subr.mxu0 0.0
        %385 = vmatpush2.msra.mxu0 0.0
        %386 = vmatprep.subr.mxu0 0.0
        %387 = vmatpush2.msra.mxu0 0.0
        %388 = vmatprep.subr.mxu0 0.0
        %389 = vmatpush2.msra.mxu0 0.0
        %390 = vmatprep.subr.mxu0 0.0
        %391 = vmatpush2.msra.mxu0 0.0
        %392 = vmatprep.subr.mxu0 0.0
        %393 = vmatpush2.msra.mxu0 0.0
        %394 = vmatprep.mubr.f32.mxu0 0.0
        %395 = vmatmul.mubr.f32.gmra.mxu0 %v328
        %v396 = vpop.f32.mrf.mxu0
        %v397 = vadd.f32 0.0, %v396
        %v398 = vpop.f32.mrf.mxu0
        %399 = vdwg.mxu0
        %v400 = vmax.f32 %v397, 0.0
        %v401 = vld [vmem:[%s2] sm:$0xff]
        %v402 = vld [vmem:[%s2 + $0x8] sm:$0xff]
        %vm403 = vcmask 15360
        %v405 = vsel %vm403, %v401, 0
        %v408 = vsel %vm403, %v402, 0
        %vm410 = vcmask 1041408
        %v412 = vsel %vm410, %v400, 0
        %414 = vmatprep.subr.mxu0 0.0
        %415 = vmatpush1.msra.mxu0 0.0
        %416 = vmatprep.subr.mxu0 0.0
        %417 = vmatpush1.msra.mxu0 0.0
        %418 = vmatprep.subr.mxu0 0.0
        %419 = vmatpush1.msra.mxu0 0.0
        %420 = vmatprep.subr.mxu0 0.0
        %421 = vmatpush1.msra.mxu0 0.0
        %422 = vmatprep.subr.mxu0 0.0
        %423 = vmatpush1.msra.mxu0 0.0
        %424 = vmatprep.subr.mxu0 0.0
        %425 = vmatpush1.msra.mxu0 0.0
        %426 = vmatprep.subr.mxu0 0.0
        %427 = vmatpush1.msra.mxu0 0.0
        %428 = vmatprep.subr.mxu0 0.0
        %429 = vmatpush1.msra.mxu0 0.0
        %430 = vmatprep.subr.mxu0 0.0
        %431 = vmatpush1.msra.mxu0 0.0
        %432 = vmatprep.subr.mxu0 0.0
        %433 = vmatpush1.msra.mxu0 0.0
        %434 = vmatprep.subr.mxu0 0.0
        %435 = vmatpush1.msra.mxu0 0.0
        %436 = vmatprep.subr.mxu0 0.0
        %437 = vmatpush1.msra.mxu0 0.0
        %438 = vmatprep.subr.mxu0 0.0
        %439 = vmatpush1.msra.mxu0 0.0
        %440 = vmatprep.subr.mxu0 0.0
        %441 = vmatpush1.msra.mxu0 0.0
        %442 = vmatprep.subr.mxu0 0.0
        %443 = vmatpush1.msra.mxu0 0.0
        %444 = vmatprep.subr.mxu0 0.0
        %445 = vmatpush1.msra.mxu0 %v412
        %446 = vmatprep.subr.mxu0 0.0
        %447 = vmatpush2.msra.mxu0 0.0
        %448 = vmatprep.subr.mxu0 0.0
        %449 = vmatpush2.msra.mxu0 0.0
        %450 = vmatprep.subr.mxu0 0.0
        %451 = vmatpush2.msra.mxu0 0.0
        %452 = vmatprep.subr.mxu0 0.0
        %453 = vmatpush2.msra.mxu0 0.0
        %454 = vmatprep.subr.mxu0 0.0
        %455 = vmatpush2.msra.mxu0 0.0
        %456 = vmatprep.subr.mxu0 0.0
        %457 = vmatpush2.msra.mxu0 0.0
        %458 = vmatprep.subr.mxu0 0.0
        %459 = vmatpush2.msra.mxu0 0.0
        %460 = vmatprep.subr.mxu0 0.0
        %461 = vmatpush2.msra.mxu0 0.0
        %462 = vmatprep.subr.mxu0 0.0
        %463 = vmatpush2.msra.mxu0 0.0
        %464 = vmatprep.subr.mxu0 0.0
        %465 = vmatpush2.msra.mxu0 0.0
        %466 = vmatprep.subr.mxu0 0.0
        %467 = vmatpush2.msra.mxu0 0.0
        %468 = vmatprep.subr.mxu0 0.0
        %469 = vmatpush2.msra.mxu0 0.0
        %470 = vmatprep.subr.mxu0 0.0
        %471 = vmatpush2.msra.mxu0 0.0
        %472 = vmatprep.subr.mxu0 0.0
        %473 = vmatpush2.msra.mxu0 0.0
        %474 = vmatprep.subr.mxu0 0.0
        %475 = vmatpush2.msra.mxu0 0.0
        %476 = vmatprep.subr.mxu0 0.0
        %477 = vmatpush2.msra.mxu0 0.0
        %478 = vmatprep.mubr.f32.mxu0 0.0
        %479 = vmatmul.mubr.f32.gmra.mxu0 %v405
        %v480 = vpop.f32.mrf.mxu0
        %v481 = vadd.f32 0.0, %v480
        %v482 = vpop.f32.mrf.mxu0
        %483 = vmatprep.mubr.f32.mxu0 0.0
        %484 = vmatmul.mubr.f32.gmra.mxu0 %v408
        %v485 = vpop.f32.mrf.mxu0
        %v486 = vadd.f32 0.0, %v485
        %v487 = vpop.f32.mrf.mxu0
        %488 = vdwg.mxu0
        %489 = vst [vmem:[#allocation2 + $0x10] sm:$0xff] 0.0
        %490 = vst [vmem:[#allocation3 + $0x10] sm:$0xff] 0.0
        %493 = vrot.lane.b32.xlu0 %v481, 127
        %v494 = vpop.permute.xlu0 %493
        %495 = vrot.lane.b32.xlu0 %v486, 127
        %v496 = vpop.permute.xlu0 %495
        %v499 = vadd.f32 %v481, %v494
        %v500 = vadd.f32 %v486, %v496
        %v501 = vxor.u32 %v499, 2147483648
        %v502 = vxor.u32 %v500, 2147483648
        %v503 = vmul.f32 %v501, 1.442695
        %v504 = vpow.pop %v503
        %v505 = vmul.f32 %v502, 1.442695
        %v506 = vpow.pop %v505
        %v507 = vadd.f32 %v504, 1.0
        %v508 = vadd.f32 %v506, 1.0
        %v509 = vrcp.pop %v507
        %v510 = vmul.f32 1.0, %v509
        %v511 = vrcp.pop %v508
        %v512 = vmul.f32 1.0, %v511
        %v513 = vld [vmem:[%s235] sm:$0xff]
        %v514 = vld [vmem:[%s235 + $0x8] sm:$0xff]
        %v515 = vld [vmem:[%s235 + $0x10] sm:$0xff]
        %v516 = vld [vmem:[%s235 + $0x18] sm:$0xff]
        %518 = vset.pattern.permute.xlu0 0
        %519 = vperm.xlu0 %518, %v510
        %v520 = vpop.permute.xlu0 %519
        %523 = vset.pattern.permute.xlu0 0
        %524 = vperm.xlu0 %523, %v512
        %v525 = vpop.permute.xlu0 %524
        %v527 = vmul.f32 %v513, %v520
        %v528 = vmul.f32 %v514, %v520
        %v529 = vmul.f32 %v515, %v525
        %v530 = vmul.f32 %v516, %v525
        %531 = vst [vmem:[%s270] sm:$0xff] %v527
        %532 = vst [vmem:[%s270 + $0x8] sm:$0xff] %v528
        %533 = vst [vmem:[%s270 + $0x10] sm:$0xff] %v529
        %534 = vst [vmem:[%s270 + $0x18] sm:$0xff] %v530
        %v535 = vadd.f32 %v527, %v529
        %v536 = vrot.slane %v535, 4
        %v537 = vadd.f32 %v535, %v536
        %v538 = vrot.slane %v537, 2
        %v539 = vadd.f32 %v537, %v538
        %v540 = vrot.slane %v539, 1
        %v541 = vadd.f32 %v539, %v540
        %v542 = vadd.f32 %v528, %v530
        %v543 = vrot.slane %v542, 4
        %v544 = vadd.f32 %v542, %v543
        %v545 = vrot.slane %v544, 2
        %v546 = vadd.f32 %v544, %v545
        %v547 = vrot.slane %v546, 1
        %v548 = vadd.f32 %v546, %v547
        %v549 = vrcp.pop 16.0
        %v550 = vmul.f32 %v541, %v549
        %v551 = vmul.f32 %v548, %v549
        %v554 = vcombine.low %v550, %v551
        %v556 = vunpack.c.l.s4 1966171168
        %v557 = vunpack.c.0.s8 %v556
        %v558 = vlaneseq
        %v559 = vshrl.u32 %v558, 7
        %v560 = vsub.s32 %v557, %v559
        %v561 = vrot.slane %v554, %v560
        %v563 = vunpack.c.l.s4 1966171168
        %v564 = vunpack.c.0.s8 %v563
        %v565 = vlaneseq
        %v566 = vshrl.u32 %v565, 7
        %v567 = vsub.s32 %v564, %v566
        %v568 = vrot.slane %v561, %v567
        %v570 = vlaneseq
        %vm571 = vcmp.ge.s32.totalorder %v570, 0
        %vm572 = vcmp.lt.s32.totalorder %v570, 256
        %vm573 = vmand %vm571, %vm572
        %574 = vst.msk [vmem:[#allocation2] ss:$8 sm:$0x3] %vm573, %v568
        %575 = vst.msk [vmem:[#allocation2] ss:$8 sm:$0x0] %vm573, %v568
        %v576 = vmax.f32 %v527, %v529
        %v577 = vrot.slane %v576, 4
        %v578 = vmax.f32 %v576, %v577
        %v579 = vrot.slane %v578, 2
        %v580 = vmax.f32 %v578, %v579
        %v581 = vrot.slane %v580, 1
        %v582 = vmax.f32 %v580, %v581
        %v583 = vmax.f32 %v528, %v530
        %v584 = vrot.slane %v583, 4
        %v585 = vmax.f32 %v583, %v584
        %v586 = vrot.slane %v585, 2
        %v587 = vmax.f32 %v585, %v586
        %v588 = vrot.slane %v587, 1
        %v589 = vmax.f32 %v587, %v588
        %v592 = vcombine.low %v582, %v589
        %v594 = vunpack.c.l.s4 1966171168
        %v595 = vunpack.c.0.s8 %v594
        %v596 = vlaneseq
        %v597 = vshrl.u32 %v596, 7
        %v598 = vsub.s32 %v595, %v597
        %v599 = vrot.slane %v592, %v598
        %v601 = vunpack.c.l.s4 1966171168
        %v602 = vunpack.c.0.s8 %v601
        %v603 = vlaneseq
        %v604 = vshrl.u32 %v603, 7
        %v605 = vsub.s32 %v602, %v604
        %v606 = vrot.slane %v599, %v605
        %608 = vst.msk [vmem:[#allocation3] ss:$8 sm:$0x3] %vm573, %v606
        %609 = vst.msk [vmem:[#allocation3] ss:$8 sm:$0x0] %vm573, %v606
        %v610 = vld [vmem:[%s292] sm:$0xff]
        %v611 = vld [vmem:[%s292 + $0x8] sm:$0xff]
        %v612 = vld [vmem:[%s292 + $0x10] sm:$0xff]
        %v613 = vld [vmem:[%s292 + $0x18] sm:$0xff]
        %614 = vset.pattern.permute.xlu0 2
        %615 = vperm.xlu0 %614, %v510
        %v616 = vpop.permute.xlu0 %615
        %618 = vset.pattern.permute.xlu0 2
        %619 = vperm.xlu0 %618, %v512
        %v620 = vpop.permute.xlu0 %619
        %v622 = vmul.f32 %v610, %v616
        %v623 = vmul.f32 %v611, %v616
        %v624 = vmul.f32 %v612, %v620
        %v625 = vmul.f32 %v613, %v620
        %s626 = scalar_lea.vmem %s270, 32 [#allocation11]
        %627 = vst [vmem:[%s626] sm:$0xff] %v622
        %628 = vst [vmem:[%s626 + $0x8] sm:$0xff] %v623
        %629 = vst [vmem:[%s626 + $0x10] sm:$0xff] %v624
        %630 = vst [vmem:[%s626 + $0x18] sm:$0xff] %v625
        %v631 = vadd.f32 %v622, %v624
        %v632 = vrot.slane %v631, 4
        %v633 = vadd.f32 %v631, %v632
        %v634 = vrot.slane %v633, 2
        %v635 = vadd.f32 %v633, %v634
        %v636 = vrot.slane %v635, 1
        %v637 = vadd.f32 %v635, %v636
        %v638 = vadd.f32 %v623, %v625
        %v639 = vrot.slane %v638, 4
        %v640 = vadd.f32 %v638, %v639
        %v641 = vrot.slane %v640, 2
        %v642 = vadd.f32 %v640, %v641
        %v643 = vrot.slane %v642, 1
        %v644 = vadd.f32 %v642, %v643
        %v645 = vmul.f32 %v637, %v549
        %v646 = vmul.f32 %v644, %v549
        %v649 = vcombine.low %v645, %v646
        %v651 = vunpack.c.l.s4 1966171168
        %v652 = vunpack.c.0.s8 %v651
        %v653 = vlaneseq
        %v654 = vshrl.u32 %v653, 7
        %v655 = vsub.s32 %v652, %v654
        %v656 = vrot.slane %v649, %v655
        %v658 = vunpack.c.l.s4 1966171168
        %v659 = vunpack.c.0.s8 %v658
        %v660 = vlaneseq
        %v661 = vshrl.u32 %v660, 7
        %v662 = vsub.s32 %v659, %v661
        %v663 = vrot.slane %v656, %v662
        %s665 = scalar_lea.vmem [#allocation2], 1
        %666 = vst.msk [vmem:[%s665] ss:$8 sm:$0x3] %vm573, %v663
        %667 = vst.msk [vmem:[%s665] ss:$8 sm:$0x0] %vm573, %v663
        %v668 = vmax.f32 %v622, %v624
        %v669 = vrot.slane %v668, 4
        %v670 = vmax.f32 %v668, %v669
        %v671 = vrot.slane %v670, 2
        %v672 = vmax.f32 %v670, %v671
        %v673 = vrot.slane %v672, 1
        %v674 = vmax.f32 %v672, %v673
        %v675 = vmax.f32 %v623, %v625
        %v676 = vrot.slane %v675, 4
        %v677 = vmax.f32 %v675, %v676
        %v678 = vrot.slane %v677, 2
        %v679 = vmax.f32 %v677, %v678
        %v680 = vrot.slane %v679, 1
        %v681 = vmax.f32 %v679, %v680
        %v684 = vcombine.low %v674, %v681
        %v686 = vunpack.c.l.s4 1966171168
        %v687 = vunpack.c.0.s8 %v686
        %v688 = vlaneseq
        %v689 = vshrl.u32 %v688, 7
        %v690 = vsub.s32 %v687, %v689
        %v691 = vrot.slane %v684, %v690
        %v693 = vunpack.c.l.s4 1966171168
        %v694 = vunpack.c.0.s8 %v693
        %v695 = vlaneseq
        %v696 = vshrl.u32 %v695, 7
        %v697 = vsub.s32 %v694, %v696
        %v698 = vrot.slane %v691, %v697
        %s700 = scalar_lea.vmem [#allocation3], 1
        %701 = vst.msk [vmem:[%s700] ss:$8 sm:$0x3] %vm573, %v698
        %702 = vst.msk [vmem:[%s700] ss:$8 sm:$0x0] %vm573, %v698
        %v703 = vld [vmem:[#allocation2] sm:$0xff]
        %v704 = vld [vmem:[#allocation2 + $0x8] sm:$0xff]
        %v705 = vld [vmem:[#allocation2 + $0x10] sm:$0xff]
        %v706 = vld [vmem:[#allocation3] sm:$0xff]
        %v707 = vld [vmem:[#allocation3 + $0x8] sm:$0xff]
        %v708 = vld [vmem:[#allocation3 + $0x10] sm:$0xff]
        %709 = vrot.lane.b32.xlu0 %v703, 48
        %v710 = vpop.permute.xlu0 %709
        %711 = vrot.lane.b32.xlu0 %v704, 48
        %v712 = vpop.permute.xlu0 %711
        %713 = vrot.lane.b32.xlu0 %v705, 48
        %v714 = vpop.permute.xlu0 %713
        %vm715 = vcmp.lt.s32.totalorder %v312, 48
        %v716 = vsel %vm715, %v712, %v714
        %v717 = vsel %vm715, %v710, %v712
        %v718 = vsel %vm715, %v714, %v710
        %719 = vrot.lane.b32.xlu0 %v706, 48
        %v720 = vpop.permute.xlu0 %719
        %721 = vrot.lane.b32.xlu0 %v707, 48
        %v722 = vpop.permute.xlu0 %721
        %723 = vrot.lane.b32.xlu0 %v708, 48
        %v724 = vpop.permute.xlu0 %723
        %v725 = vsel %vm715, %v722, %v724
        %v726 = vsel %vm715, %v720, %v722
        %v727 = vsel %vm715, %v724, %v720
        %s728 = sld [smem:[#allocation10]]
        %v729 = vstv %s728
        %v730 = vmul.f32 %v729, %v718
        %v731 = vmul.f32 %v729, %v717
        %v732 = vmul.f32 %v729, %v716
        %v733 = vadd.f32 %v730, 0.0
        %v734 = vadd.f32 %v731, 0.0
        %v735 = vadd.f32 %v732, 0.0
        %s736 = sld [smem:[#allocation10 + $0x31]]
        %v737 = vstv %s736
        %v738 = vmul.f32 %v737, %v727
        %v739 = vmul.f32 %v737, %v726
        %v740 = vmul.f32 %v737, %v725
        %v741 = vadd.f32 %v733, %v738
        %v742 = vadd.f32 %v734, %v739
        %v743 = vadd.f32 %v735, %v740
        %s744 = sld [smem:[#allocation10 + $0x1]]
        %v745 = vstv %s744
        %v746 = vmul.f32 %v745, %v718
        %v747 = vmul.f32 %v745, %v717
        %v748 = vmul.f32 %v745, %v716
        %v749 = vadd.f32 %v746, 0.0
        %v750 = vadd.f32 %v747, 0.0
        %v751 = vadd.f32 %v748, 0.0
        %s752 = sld [smem:[#allocation10 + $0x32]]
        %v753 = vstv %s752
        %v754 = vmul.f32 %v753, %v727
        %v755 = vmul.f32 %v753, %v726
        %v756 = vmul.f32 %v753, %v725
        %v757 = vadd.f32 %v749, %v754
        %v758 = vadd.f32 %v750, %v755
        %v759 = vadd.f32 %v751, %v756
        %s760 = sld [smem:[#allocation10 + $0x2]]
        %v761 = vstv %s760
        %v762 = vmul.f32 %v761, %v718
        %v763 = vmul.f32 %v761, %v717
        %v764 = vmul.f32 %v761, %v716
        %v765 = vadd.f32 %v762, 0.0
        %v766 = vadd.f32 %v763, 0.0
        %v767 = vadd.f32 %v764, 0.0
        %s768 = sld [smem:[#allocation10 + $0x33]]
        %v769 = vstv %s768
        %v770 = vmul.f32 %v769, %v727
        %v771 = vmul.f32 %v769, %v726
        %v772 = vmul.f32 %v769, %v725
        %v773 = vadd.f32 %v765, %v770
        %v774 = vadd.f32 %v766, %v771
        %v775 = vadd.f32 %v767, %v772
        %s776 = sld [smem:[#allocation10 + $0x3]]
        %v777 = vstv %s776
        %v778 = vmul.f32 %v777, %v718
        %v779 = vmul.f32 %v777, %v717
        %v780 = vadd.f32 %v778, 0.0
        %v781 = vadd.f32 %v779, 0.0
        %s782 = sld [smem:[#allocation10 + $0x34]]
        %v783 = vstv %s782
        %v784 = vmul.f32 %v783, %v727
        %v785 = vmul.f32 %v783, %v726
        %v786 = vadd.f32 %v780, %v784
        %v787 = vadd.f32 %v781, %v785
        %s788 = sld [smem:[#allocation10 + $0x4]]
        %v789 = vstv %s788
        %v790 = vmul.f32 %v789, %v718
        %v791 = vmul.f32 %v789, %v717
        %v792 = vmul.f32 %v789, %v716
        %v793 = vadd.f32 %v790, 0.0
        %v794 = vadd.f32 %v791, 0.0
        %v795 = vadd.f32 %v792, 0.0
        %s796 = sld [smem:[#allocation10 + $0x35]]
        %v797 = vstv %s796
        %v798 = vmul.f32 %v797, %v727
        %v799 = vmul.f32 %v797, %v726
        %v800 = vmul.f32 %v797, %v725
        %v801 = vadd.f32 %v793, %v798
        %v802 = vadd.f32 %v794, %v799
        %v803 = vadd.f32 %v795, %v800
        %s804 = sld [smem:[#allocation10 + $0x5]]
        %v805 = vstv %s804
        %v806 = vmul.f32 %v805, %v718
        %v807 = vmul.f32 %v805, %v717
        %v808 = vmul.f32 %v805, %v716
        %v809 = vadd.f32 %v806, 0.0
        %v810 = vadd.f32 %v807, 0.0
        %v811 = vadd.f32 %v808, 0.0
        %s812 = sld [smem:[#allocation10 + $0x36]]
        %v813 = vstv %s812
        %v814 = vmul.f32 %v813, %v727
        %v815 = vmul.f32 %v813, %v726
        %v816 = vmul.f32 %v813, %v725
        %v817 = vadd.f32 %v809, %v814
        %v818 = vadd.f32 %v810, %v815
        %v819 = vadd.f32 %v811, %v816
        %s820 = sld [smem:[#allocation10 + $0x6]]
        %v821 = vstv %s820
        %v822 = vmul.f32 %v821, %v718
        %v823 = vmul.f32 %v821, %v717
        %v824 = vmul.f32 %v821, %v716
        %v825 = vadd.f32 %v822, 0.0
        %v826 = vadd.f32 %v823, 0.0
        %v827 = vadd.f32 %v824, 0.0
        %s828 = sld [smem:[#allocation10 + $0x37]]
        %v829 = vstv %s828
        %v830 = vmul.f32 %v829, %v727
        %v831 = vmul.f32 %v829, %v726
        %v832 = vmul.f32 %v829, %v725
        %v833 = vadd.f32 %v825, %v830
        %v834 = vadd.f32 %v826, %v831
        %v835 = vadd.f32 %v827, %v832
        %836 = vrot.lane.b32.xlu0 %v703, 32
        %v837 = vpop.permute.xlu0 %836
        %838 = vrot.lane.b32.xlu0 %v704, 32
        %v839 = vpop.permute.xlu0 %838
        %840 = vrot.lane.b32.xlu0 %v705, 32
        %v841 = vpop.permute.xlu0 %840
        %vm842 = vcmp.lt.s32.totalorder %v312, 32
        %v843 = vsel %vm842, %v839, %v841
        %v844 = vsel %vm842, %v837, %v839
        %v845 = vsel %vm842, %v841, %v837
        %846 = vrot.lane.b32.xlu0 %v706, 32
        %v847 = vpop.permute.xlu0 %846
        %848 = vrot.lane.b32.xlu0 %v707, 32
        %v849 = vpop.permute.xlu0 %848
        %850 = vrot.lane.b32.xlu0 %v708, 32
        %v851 = vpop.permute.xlu0 %850
        %v852 = vsel %vm842, %v849, %v851
        %v853 = vsel %vm842, %v847, %v849
        %v854 = vsel %vm842, %v851, %v847
        %s855 = sld [smem:[#allocation10 + $0x7]]
        %v856 = vstv %s855
        %v857 = vmul.f32 %v856, %v845
        %v858 = vmul.f32 %v856, %v844
        %v859 = vmul.f32 %v856, %v843
        %v860 = vadd.f32 %v741, %v857
        %v861 = vadd.f32 %v742, %v858
        %v862 = vadd.f32 %v743, %v859
        %s863 = sld [smem:[#allocation10 + $0x38]]
        %v864 = vstv %s863
        %v865 = vmul.f32 %v864, %v854
        %v866 = vmul.f32 %v864, %v853
        %v867 = vmul.f32 %v864, %v852
        %v868 = vadd.f32 %v860, %v865
        %v869 = vadd.f32 %v861, %v866
        %v870 = vadd.f32 %v862, %v867
        %s871 = sld [smem:[#allocation10 + $0x8]]
        %v872 = vstv %s871
        %v873 = vmul.f32 %v872, %v845
        %v874 = vmul.f32 %v872, %v844
        %v875 = vmul.f32 %v872, %v843
        %v876 = vadd.f32 %v757, %v873
        %v877 = vadd.f32 %v758, %v874
        %v878 = vadd.f32 %v759, %v875
        %s879 = sld [smem:[#allocation10 + $0x39]]
        %v880 = vstv %s879
        %v881 = vmul.f32 %v880, %v854
        %v882 = vmul.f32 %v880, %v853
        %v883 = vmul.f32 %v880, %v852
        %v884 = vadd.f32 %v876, %v881
        %v885 = vadd.f32 %v877, %v882
        %v886 = vadd.f32 %v878, %v883
        %s887 = sld [smem:[#allocation10 + $0x9]]
        %v888 = vstv %s887
        %v889 = vmul.f32 %v888, %v845
        %v890 = vmul.f32 %v888, %v844
        %v891 = vmul.f32 %v888, %v843
        %v892 = vadd.f32 %v773, %v889
        %v893 = vadd.f32 %v774, %v890
        %v894 = vadd.f32 %v775, %v891
        %s895 = sld [smem:[#allocation10 + $0x3a]]
        %v896 = vstv %s895
        %v897 = vmul.f32 %v896, %v854
        %v898 = vmul.f32 %v896, %v853
        %v899 = vmul.f32 %v896, %v852
        %v900 = vadd.f32 %v892, %v897
        %v901 = vadd.f32 %v893, %v898
        %v902 = vadd.f32 %v894, %v899
        %s903 = sld [smem:[#allocation10 + $0xa]]
        %v904 = vstv %s903
        %v905 = vmul.f32 %v904, %v845
        %v906 = vmul.f32 %v904, %v844
        %v907 = vadd.f32 %v786, %v905
        %v908 = vadd.f32 %v787, %v906
        %s909 = sld [smem:[#allocation10 + $0x3b]]
        %v910 = vstv %s909
        %v911 = vmul.f32 %v910, %v854
        %v912 = vmul.f32 %v910, %v853
        %v913 = vadd.f32 %v907, %v911
        %v914 = vadd.f32 %v908, %v912
        %s915 = sld [smem:[#allocation10 + $0xb]]
        %v916 = vstv %s915
        %v917 = vmul.f32 %v916, %v845
        %v918 = vmul.f32 %v916, %v844
        %v919 = vmul.f32 %v916, %v843
        %v920 = vadd.f32 %v801, %v917
        %v921 = vadd.f32 %v802, %v918
        %v922 = vadd.f32 %v803, %v919
        %s923 = sld [smem:[#allocation10 + $0x3c]]
        %v924 = vstv %s923
        %v925 = vmul.f32 %v924, %v854
        %v926 = vmul.f32 %v924, %v853
        %v927 = vmul.f32 %v924, %v852
        %v928 = vadd.f32 %v920, %v925
        %v929 = vadd.f32 %v921, %v926
        %v930 = vadd.f32 %v922, %v927
        %s931 = sld [smem:[#allocation10 + $0xc]]
        %v932 = vstv %s931
        %v933 = vmul.f32 %v932, %v845
        %v934 = vmul.f32 %v932, %v844
        %v935 = vmul.f32 %v932, %v843
        %v936 = vadd.f32 %v817, %v933
        %v937 = vadd.f32 %v818, %v934
        %v938 = vadd.f32 %v819, %v935
        %s939 = sld [smem:[#allocation10 + $0x3d]]
        %v940 = vstv %s939
        %v941 = vmul.f32 %v940, %v854
        %v942 = vmul.f32 %v940, %v853
        %v943 = vmul.f32 %v940, %v852
        %v944 = vadd.f32 %v936, %v941
        %v945 = vadd.f32 %v937, %v942
        %v946 = vadd.f32 %v938, %v943
        %s947 = sld [smem:[#allocation10 + $0xd]]
        %v948 = vstv %s947
        %v949 = vmul.f32 %v948, %v845
        %v950 = vmul.f32 %v948, %v844
        %v951 = vmul.f32 %v948, %v843
        %v952 = vadd.f32 %v833, %v949
        %v953 = vadd.f32 %v834, %v950
        %v954 = vadd.f32 %v835, %v951
        %s955 = sld [smem:[#allocation10 + $0x3e]]
        %v956 = vstv %s955
        %v957 = vmul.f32 %v956, %v854
        %v958 = vmul.f32 %v956, %v853
        %v959 = vmul.f32 %v956, %v852
        %v960 = vadd.f32 %v952, %v957
        %v961 = vadd.f32 %v953, %v958
        %v962 = vadd.f32 %v954, %v959
        %963 = vrot.lane.b32.xlu0 %v703, 16
        %v964 = vpop.permute.xlu0 %963
        %965 = vrot.lane.b32.xlu0 %v704, 16
        %v966 = vpop.permute.xlu0 %965
        %967 = vrot.lane.b32.xlu0 %v705, 16
        %v968 = vpop.permute.xlu0 %967
        %vm969 = vcmp.lt.s32.totalorder %v312, 16
        %v970 = vsel %vm969, %v966, %v968
        %v971 = vsel %vm969, %v964, %v966
        %v972 = vsel %vm969, %v968, %v964
        %973 = vrot.lane.b32.xlu0 %v706, 16
        %v974 = vpop.permute.xlu0 %973
        %975 = vrot.lane.b32.xlu0 %v707, 16
        %v976 = vpop.permute.xlu0 %975
        %977 = vrot.lane.b32.xlu0 %v708, 16
        %v978 = vpop.permute.xlu0 %977
        %v979 = vsel %vm969, %v976, %v978
        %v980 = vsel %vm969, %v974, %v976
        %v981 = vsel %vm969, %v978, %v974
        %s982 = sld [smem:[#allocation10 + $0xe]]
        %v983 = vstv %s982
        %v984 = vmul.f32 %v983, %v972
        %v985 = vmul.f32 %v983, %v971
        %v986 = vmul.f32 %v983, %v970
        %v987 = vadd.f32 %v868, %v984
        %v988 = vadd.f32 %v869, %v985
        %v989 = vadd.f32 %v870, %v986
        %s990 = sld [smem:[#allocation10 + $0x3f]]
        %v991 = vstv %s990
        %v992 = vmul.f32 %v991, %v981
        %v993 = vmul.f32 %v991, %v980
        %v994 = vmul.f32 %v991, %v979
        %v995 = vadd.f32 %v987, %v992
        %v996 = vadd.f32 %v988, %v993
        %v997 = vadd.f32 %v989, %v994
        %s998 = sld [smem:[#allocation10 + $0xf]]
        %v999 = vstv %s998
        %v1000 = vmul.f32 %v999, %v972
        %v1001 = vmul.f32 %v999, %v971
        %v1002 = vmul.f32 %v999, %v970
        %v1003 = vadd.f32 %v884, %v1000
        %v1004 = vadd.f32 %v885, %v1001
        %v1005 = vadd.f32 %v886, %v1002
        %s1006 = sld [smem:[#allocation10 + $0x40]]
        %v1007 = vstv %s1006
        %v1008 = vmul.f32 %v1007, %v981
        %v1009 = vmul.f32 %v1007, %v980
        %v1010 = vmul.f32 %v1007, %v979
        %v1011 = vadd.f32 %v1003, %v1008
        %v1012 = vadd.f32 %v1004, %v1009
        %v1013 = vadd.f32 %v1005, %v1010
        %s1014 = sld [smem:[#allocation10 + $0x10]]
        %v1015 = vstv %s1014
        %v1016 = vmul.f32 %v1015, %v972
        %v1017 = vmul.f32 %v1015, %v971
        %v1018 = vmul.f32 %v1015, %v970
        %v1019 = vadd.f32 %v900, %v1016
        %v1020 = vadd.f32 %v901, %v1017
        %v1021 = vadd.f32 %v902, %v1018
        %s1022 = sld [smem:[#allocation10 + $0x41]]
        %v1023 = vstv %s1022
        %v1024 = vmul.f32 %v1023, %v981
        %v1025 = vmul.f32 %v1023, %v980
        %v1026 = vmul.f32 %v1023, %v979
        %v1027 = vadd.f32 %v1019, %v1024
        %v1028 = vadd.f32 %v1020, %v1025
        %v1029 = vadd.f32 %v1021, %v1026
        %s1030 = sld [smem:[#allocation10 + $0x11]]
        %v1031 = vstv %s1030
        %v1032 = vmul.f32 %v1031, %v972
        %v1033 = vmul.f32 %v1031, %v971
        %v1034 = vadd.f32 %v913, %v1032
        %v1035 = vadd.f32 %v914, %v1033
        %s1036 = sld [smem:[#allocation10 + $0x42]]
        %v1037 = vstv %s1036
        %v1038 = vmul.f32 %v1037, %v981
        %v1039 = vmul.f32 %v1037, %v980
        %v1040 = vadd.f32 %v1034, %v1038
        %v1041 = vadd.f32 %v1035, %v1039
        %s1042 = sld [smem:[#allocation10 + $0x12]]
        %v1043 = vstv %s1042
        %v1044 = vmul.f32 %v1043, %v972
        %v1045 = vmul.f32 %v1043, %v971
        %v1046 = vmul.f32 %v1043, %v970
        %v1047 = vadd.f32 %v928, %v1044
        %v1048 = vadd.f32 %v929, %v1045
        %v1049 = vadd.f32 %v930, %v1046
        %s1050 = sld [smem:[#allocation10 + $0x43]]
        %v1051 = vstv %s1050
        %v1052 = vmul.f32 %v1051, %v981
        %v1053 = vmul.f32 %v1051, %v980
        %v1054 = vmul.f32 %v1051, %v979
        %v1055 = vadd.f32 %v1047, %v1052
        %v1056 = vadd.f32 %v1048, %v1053
        %v1057 = vadd.f32 %v1049, %v1054
        %s1058 = sld [smem:[#allocation10 + $0x13]]
        %v1059 = vstv %s1058
        %v1060 = vmul.f32 %v1059, %v972
        %v1061 = vmul.f32 %v1059, %v971
        %v1062 = vmul.f32 %v1059, %v970
        %v1063 = vadd.f32 %v944, %v1060
        %v1064 = vadd.f32 %v945, %v1061
        %v1065 = vadd.f32 %v946, %v1062
        %s1066 = sld [smem:[#allocation10 + $0x44]]
        %v1067 = vstv %s1066
        %v1068 = vmul.f32 %v1067, %v981
        %v1069 = vmul.f32 %v1067, %v980
        %v1070 = vmul.f32 %v1067, %v979
        %v1071 = vadd.f32 %v1063, %v1068
        %v1072 = vadd.f32 %v1064, %v1069
        %v1073 = vadd.f32 %v1065, %v1070
        %s1074 = sld [smem:[#allocation10 + $0x14]]
        %v1075 = vstv %s1074
        %v1076 = vmul.f32 %v1075, %v972
        %v1077 = vmul.f32 %v1075, %v971
        %v1078 = vmul.f32 %v1075, %v970
        %v1079 = vadd.f32 %v960, %v1076
        %v1080 = vadd.f32 %v961, %v1077
        %v1081 = vadd.f32 %v962, %v1078
        %s1082 = sld [smem:[#allocation10 + $0x45]]
        %v1083 = vstv %s1082
        %v1084 = vmul.f32 %v1083, %v981
        %v1085 = vmul.f32 %v1083, %v980
        %v1086 = vmul.f32 %v1083, %v979
        %v1087 = vadd.f32 %v1079, %v1084
        %v1088 = vadd.f32 %v1080, %v1085
        %v1089 = vadd.f32 %v1081, %v1086
        %s1090 = sld [smem:[#allocation10 + $0x15]]
        %v1091 = vstv %s1090
        %v1092 = vmul.f32 %v1091, %v703
        %v1093 = vmul.f32 %v1091, %v704
        %v1094 = vmul.f32 %v1091, %v705
        %v1095 = vadd.f32 %v995, %v1092
        %v1096 = vadd.f32 %v996, %v1093
        %v1097 = vadd.f32 %v997, %v1094
        %s1098 = sld [smem:[#allocation10 + $0x46]]
        %v1099 = vstv %s1098
        %v1100 = vmul.f32 %v1099, %v706
        %v1101 = vmul.f32 %v1099, %v707
        %v1102 = vmul.f32 %v1099, %v708
        %v1103 = vadd.f32 %v1095, %v1100
        %v1104 = vadd.f32 %v1096, %v1101
        %v1105 = vadd.f32 %v1097, %v1102
        %s1106 = sld [smem:[#allocation10 + $0x16]]
        %v1107 = vstv %s1106
        %v1108 = vmul.f32 %v1107, %v703
        %v1109 = vmul.f32 %v1107, %v704
        %v1110 = vmul.f32 %v1107, %v705
        %v1111 = vadd.f32 %v1011, %v1108
        %v1112 = vadd.f32 %v1012, %v1109
        %v1113 = vadd.f32 %v1013, %v1110
        %s1114 = sld [smem:[#allocation10 + $0x47]]
        %v1115 = vstv %s1114
        %v1116 = vmul.f32 %v1115, %v706
        %v1117 = vmul.f32 %v1115, %v707
        %v1118 = vmul.f32 %v1115, %v708
        %v1119 = vadd.f32 %v1111, %v1116
        %v1120 = vadd.f32 %v1112, %v1117
        %v1121 = vadd.f32 %v1113, %v1118
        %s1122 = sld [smem:[#allocation10 + $0x17]]
        %v1123 = vstv %s1122
        %v1124 = vmul.f32 %v1123, %v703
        %v1125 = vmul.f32 %v1123, %v704
        %v1126 = vmul.f32 %v1123, %v705
        %v1127 = vadd.f32 %v1027, %v1124
        %v1128 = vadd.f32 %v1028, %v1125
        %v1129 = vadd.f32 %v1029, %v1126
        %s1130 = sld [smem:[#allocation10 + $0x48]]
        %v1131 = vstv %s1130
        %v1132 = vmul.f32 %v1131, %v706
        %v1133 = vmul.f32 %v1131, %v707
        %v1134 = vmul.f32 %v1131, %v708
        %v1135 = vadd.f32 %v1127, %v1132
        %v1136 = vadd.f32 %v1128, %v1133
        %v1137 = vadd.f32 %v1129, %v1134
        %s1138 = sld [smem:[#allocation10 + $0x18]]
        %v1139 = vstv %s1138
        %v1140 = vmul.f32 %v1139, %v703
        %v1141 = vmul.f32 %v1139, %v704
        %v1142 = vadd.f32 %v1040, %v1140
        %v1143 = vadd.f32 %v1041, %v1141
        %s1144 = sld [smem:[#allocation10 + $0x49]]
        %v1145 = vstv %s1144
        %v1146 = vmul.f32 %v1145, %v706
        %v1147 = vmul.f32 %v1145, %v707
        %v1148 = vadd.f32 %v1142, %v1146
        %v1149 = vadd.f32 %v1143, %v1147
        %s1150 = sld [smem:[#allocation10 + $0x19]]
        %v1151 = vstv %s1150
        %v1152 = vmul.f32 %v1151, %v703
        %v1153 = vmul.f32 %v1151, %v704
        %v1154 = vmul.f32 %v1151, %v705
        %v1155 = vadd.f32 %v1055, %v1152
        %v1156 = vadd.f32 %v1056, %v1153
        %v1157 = vadd.f32 %v1057, %v1154
        %s1158 = sld [smem:[#allocation10 + $0x4a]]
        %v1159 = vstv %s1158
        %v1160 = vmul.f32 %v1159, %v706
        %v1161 = vmul.f32 %v1159, %v707
        %v1162 = vmul.f32 %v1159, %v708
        %v1163 = vadd.f32 %v1155, %v1160
        %v1164 = vadd.f32 %v1156, %v1161
        %v1165 = vadd.f32 %v1157, %v1162
        %s1166 = sld [smem:[#allocation10 + $0x1a]]
        %v1167 = vstv %s1166
        %v1168 = vmul.f32 %v1167, %v703
        %v1169 = vmul.f32 %v1167, %v704
        %v1170 = vmul.f32 %v1167, %v705
        %v1171 = vadd.f32 %v1071, %v1168
        %v1172 = vadd.f32 %v1072, %v1169
        %v1173 = vadd.f32 %v1073, %v1170
        %s1174 = sld [smem:[#allocation10 + $0x4b]]
        %v1175 = vstv %s1174
        %v1176 = vmul.f32 %v1175, %v706
        %v1177 = vmul.f32 %v1175, %v707
        %v1178 = vmul.f32 %v1175, %v708
        %v1179 = vadd.f32 %v1171, %v1176
        %v1180 = vadd.f32 %v1172, %v1177
        %v1181 = vadd.f32 %v1173, %v1178
        %s1182 = sld [smem:[#allocation10 + $0x1b]]
        %v1183 = vstv %s1182
        %v1184 = vmul.f32 %v1183, %v703
        %v1185 = vmul.f32 %v1183, %v704
        %v1186 = vmul.f32 %v1183, %v705
        %v1187 = vadd.f32 %v1087, %v1184
        %v1188 = vadd.f32 %v1088, %v1185
        %v1189 = vadd.f32 %v1089, %v1186
        %s1190 = sld [smem:[#allocation10 + $0x4c]]
        %v1191 = vstv %s1190
        %v1192 = vmul.f32 %v1191, %v706
        %v1193 = vmul.f32 %v1191, %v707
        %v1194 = vmul.f32 %v1191, %v708
        %v1195 = vadd.f32 %v1187, %v1192
        %v1196 = vadd.f32 %v1188, %v1193
        %v1197 = vadd.f32 %v1189, %v1194
        %1198 = vrot.lane.b32.xlu0 %v703, 112
        %v1199 = vpop.permute.xlu0 %1198
        %1200 = vrot.lane.b32.xlu0 %v704, 112
        %v1201 = vpop.permute.xlu0 %1200
        %1202 = vrot.lane.b32.xlu0 %v705, 112
        %v1203 = vpop.permute.xlu0 %1202
        %vm1204 = vcmp.lt.s32.totalorder %v312, 112
        %v1205 = vsel %vm1204, %v1201, %v1203
        %v1206 = vsel %vm1204, %v1199, %v1201
        %v1207 = vsel %vm1204, %v1203, %v1199
        %1208 = vrot.lane.b32.xlu0 %v706, 112
        %v1209 = vpop.permute.xlu0 %1208
        %1210 = vrot.lane.b32.xlu0 %v707, 112
        %v1211 = vpop.permute.xlu0 %1210
        %1212 = vrot.lane.b32.xlu0 %v708, 112
        %v1213 = vpop.permute.xlu0 %1212
        %v1214 = vsel %vm1204, %v1211, %v1213
        %v1215 = vsel %vm1204, %v1209, %v1211
        %v1216 = vsel %vm1204, %v1213, %v1209
        %s1217 = sld [smem:[#allocation10 + $0x1c]]
        %v1218 = vstv %s1217
        %v1219 = vmul.f32 %v1218, %v1206
        %v1220 = vmul.f32 %v1218, %v1205
        %v1221 = vmul.f32 %v1218, %v1207
        %v1222 = vadd.f32 %v1103, %v1219
        %v1223 = vadd.f32 %v1104, %v1220
        %v1224 = vadd.f32 %v1105, %v1221
        %s1225 = sld [smem:[#allocation10 + $0x4d]]
        %v1226 = vstv %s1225
        %v1227 = vmul.f32 %v1226, %v1215
        %v1228 = vmul.f32 %v1226, %v1214
        %v1229 = vmul.f32 %v1226, %v1216
        %v1230 = vadd.f32 %v1222, %v1227
        %v1231 = vadd.f32 %v1223, %v1228
        %v1232 = vadd.f32 %v1224, %v1229
        %s1233 = sld [smem:[#allocation10 + $0x1d]]
        %v1234 = vstv %s1233
        %v1235 = vmul.f32 %v1234, %v1206
        %v1236 = vmul.f32 %v1234, %v1205
        %v1237 = vmul.f32 %v1234, %v1207
        %v1238 = vadd.f32 %v1119, %v1235
        %v1239 = vadd.f32 %v1120, %v1236
        %v1240 = vadd.f32 %v1121, %v1237
        %s1241 = sld [smem:[#allocation10 + $0x4e]]
        %v1242 = vstv %s1241
        %v1243 = vmul.f32 %v1242, %v1215
        %v1244 = vmul.f32 %v1242, %v1214
        %v1245 = vmul.f32 %v1242, %v1216
        %v1246 = vadd.f32 %v1238, %v1243
        %v1247 = vadd.f32 %v1239, %v1244
        %v1248 = vadd.f32 %v1240, %v1245
        %s1249 = sld [smem:[#allocation10 + $0x1e]]
        %v1250 = vstv %s1249
        %v1251 = vmul.f32 %v1250, %v1206
        %v1252 = vmul.f32 %v1250, %v1205
        %v1253 = vmul.f32 %v1250, %v1207
        %v1254 = vadd.f32 %v1135, %v1251
        %v1255 = vadd.f32 %v1136, %v1252
        %v1256 = vadd.f32 %v1137, %v1253
        %s1257 = sld [smem:[#allocation10 + $0x4f]]
        %v1258 = vstv %s1257
        %v1259 = vmul.f32 %v1258, %v1215
        %v1260 = vmul.f32 %v1258, %v1214
        %v1261 = vmul.f32 %v1258, %v1216
        %v1262 = vadd.f32 %v1254, %v1259
        %v1263 = vadd.f32 %v1255, %v1260
        %v1264 = vadd.f32 %v1256, %v1261
        %s1265 = sld [smem:[#allocation10 + $0x1f]]
        %v1266 = vstv %s1265
        %v1267 = vmul.f32 %v1266, %v1206
        %v1268 = vmul.f32 %v1266, %v1205
        %v1269 = vadd.f32 %v1148, %v1267
        %v1270 = vadd.f32 %v1149, %v1268
        %s1271 = sld [smem:[#allocation10 + $0x50]]
        %v1272 = vstv %s1271
        %v1273 = vmul.f32 %v1272, %v1215
        %v1274 = vmul.f32 %v1272, %v1214
        %v1275 = vadd.f32 %v1269, %v1273
        %v1276 = vadd.f32 %v1270, %v1274
        %s1277 = sld [smem:[#allocation10 + $0x20]]
        %v1278 = vstv %s1277
        %v1279 = vmul.f32 %v1278, %v1206
        %v1280 = vmul.f32 %v1278, %v1205
        %v1281 = vmul.f32 %v1278, %v1207
        %v1282 = vadd.f32 %v1163, %v1279
        %v1283 = vadd.f32 %v1164, %v1280
        %v1284 = vadd.f32 %v1165, %v1281
        %s1285 = sld [smem:[#allocation10 + $0x51]]
        %v1286 = vstv %s1285
        %v1287 = vmul.f32 %v1286, %v1215
        %v1288 = vmul.f32 %v1286, %v1214
        %v1289 = vmul.f32 %v1286, %v1216
        %v1290 = vadd.f32 %v1282, %v1287
        %v1291 = vadd.f32 %v1283, %v1288
        %v1292 = vadd.f32 %v1284, %v1289
        %s1293 = sld [smem:[#allocation10 + $0x21]]
        %v1294 = vstv %s1293
        %v1295 = vmul.f32 %v1294, %v1206
        %v1296 = vmul.f32 %v1294, %v1205
        %v1297 = vmul.f32 %v1294, %v1207
        %v1298 = vadd.f32 %v1179, %v1295
        %v1299 = vadd.f32 %v1180, %v1296
        %v1300 = vadd.f32 %v1181, %v1297
        %s1301 = sld [smem:[#allocation10 + $0x52]]
        %v1302 = vstv %s1301
        %v1303 = vmul.f32 %v1302, %v1215
        %v1304 = vmul.f32 %v1302, %v1214
        %v1305 = vmul.f32 %v1302, %v1216
        %v1306 = vadd.f32 %v1298, %v1303
        %v1307 = vadd.f32 %v1299, %v1304
        %v1308 = vadd.f32 %v1300, %v1305
        %s1309 = sld [smem:[#allocation10 + $0x22]]
        %v1310 = vstv %s1309
        %v1311 = vmul.f32 %v1310, %v1206
        %v1312 = vmul.f32 %v1310, %v1205
        %v1313 = vmul.f32 %v1310, %v1207
        %v1314 = vadd.f32 %v1195, %v1311
        %v1315 = vadd.f32 %v1196, %v1312
        %v1316 = vadd.f32 %v1197, %v1313
        %s1317 = sld [smem:[#allocation10 + $0x53]]
        %v1318 = vstv %s1317
        %v1319 = vmul.f32 %v1318, %v1215
        %v1320 = vmul.f32 %v1318, %v1214
        %v1321 = vmul.f32 %v1318, %v1216
        %v1322 = vadd.f32 %v1314, %v1319
        %v1323 = vadd.f32 %v1315, %v1320
        %v1324 = vadd.f32 %v1316, %v1321
        %1325 = vrot.lane.b32.xlu0 %v703, 96
        %v1326 = vpop.permute.xlu0 %1325
        %1327 = vrot.lane.b32.xlu0 %v704, 96
        %v1328 = vpop.permute.xlu0 %1327
        %1329 = vrot.lane.b32.xlu0 %v705, 96
        %v1330 = vpop.permute.xlu0 %1329
        %vm1331 = vcmp.lt.s32.totalorder %v312, 96
        %v1332 = vsel %vm1331, %v1328, %v1330
        %v1333 = vsel %vm1331, %v1326, %v1328
        %v1334 = vsel %vm1331, %v1330, %v1326
        %1335 = vrot.lane.b32.xlu0 %v706, 96
        %v1336 = vpop.permute.xlu0 %1335
        %1337 = vrot.lane.b32.xlu0 %v707, 96
        %v1338 = vpop.permute.xlu0 %1337
        %1339 = vrot.lane.b32.xlu0 %v708, 96
        %v1340 = vpop.permute.xlu0 %1339
        %v1341 = vsel %vm1331, %v1338, %v1340
        %v1342 = vsel %vm1331, %v1336, %v1338
        %v1343 = vsel %vm1331, %v1340, %v1336
        %s1344 = sld [smem:[#allocation10 + $0x23]]
        %v1345 = vstv %s1344
        %v1346 = vmul.f32 %v1345, %v1333
        %v1347 = vmul.f32 %v1345, %v1332
        %v1348 = vmul.f32 %v1345, %v1334
        %v1349 = vadd.f32 %v1230, %v1346
        %v1350 = vadd.f32 %v1231, %v1347
        %v1351 = vadd.f32 %v1232, %v1348
        %s1352 = sld [smem:[#allocation10 + $0x54]]
        %v1353 = vstv %s1352
        %v1354 = vmul.f32 %v1353, %v1342
        %v1355 = vmul.f32 %v1353, %v1341
        %v1356 = vmul.f32 %v1353, %v1343
        %v1357 = vadd.f32 %v1349, %v1354
        %v1358 = vadd.f32 %v1350, %v1355
        %v1359 = vadd.f32 %v1351, %v1356
        %s1360 = sld [smem:[#allocation10 + $0x24]]
        %v1361 = vstv %s1360
        %v1362 = vmul.f32 %v1361, %v1333
        %v1363 = vmul.f32 %v1361, %v1332
        %v1364 = vmul.f32 %v1361, %v1334
        %v1365 = vadd.f32 %v1246, %v1362
        %v1366 = vadd.f32 %v1247, %v1363
        %v1367 = vadd.f32 %v1248, %v1364
        %s1368 = sld [smem:[#allocation10 + $0x55]]
        %v1369 = vstv %s1368
        %v1370 = vmul.f32 %v1369, %v1342
        %v1371 = vmul.f32 %v1369, %v1341
        %v1372 = vmul.f32 %v1369, %v1343
        %v1373 = vadd.f32 %v1365, %v1370
        %v1374 = vadd.f32 %v1366, %v1371
        %v1375 = vadd.f32 %v1367, %v1372
        %s1376 = sld [smem:[#allocation10 + $0x25]]
        %v1377 = vstv %s1376
        %v1378 = vmul.f32 %v1377, %v1333
        %v1379 = vmul.f32 %v1377, %v1332
        %v1380 = vmul.f32 %v1377, %v1334
        %v1381 = vadd.f32 %v1262, %v1378
        %v1382 = vadd.f32 %v1263, %v1379
        %v1383 = vadd.f32 %v1264, %v1380
        %s1384 = sld [smem:[#allocation10 + $0x56]]
        %v1385 = vstv %s1384
        %v1386 = vmul.f32 %v1385, %v1342
        %v1387 = vmul.f32 %v1385, %v1341
        %v1388 = vmul.f32 %v1385, %v1343
        %v1389 = vadd.f32 %v1381, %v1386
        %v1390 = vadd.f32 %v1382, %v1387
        %v1391 = vadd.f32 %v1383, %v1388
        %s1392 = sld [smem:[#allocation10 + $0x26]]
        %v1393 = vstv %s1392
        %v1394 = vmul.f32 %v1393, %v1333
        %v1395 = vmul.f32 %v1393, %v1332
        %v1396 = vadd.f32 %v1275, %v1394
        %v1397 = vadd.f32 %v1276, %v1395
        %s1398 = sld [smem:[#allocation10 + $0x57]]
        %v1399 = vstv %s1398
        %v1400 = vmul.f32 %v1399, %v1342
        %v1401 = vmul.f32 %v1399, %v1341
        %v1402 = vadd.f32 %v1396, %v1400
        %v1403 = vadd.f32 %v1397, %v1401
        %s1404 = sld [smem:[#allocation10 + $0x27]]
        %v1405 = vstv %s1404
        %v1406 = vmul.f32 %v1405, %v1333
        %v1407 = vmul.f32 %v1405, %v1332
        %v1408 = vmul.f32 %v1405, %v1334
        %v1409 = vadd.f32 %v1290, %v1406
        %v1410 = vadd.f32 %v1291, %v1407
        %v1411 = vadd.f32 %v1292, %v1408
        %s1412 = sld [smem:[#allocation10 + $0x58]]
        %v1413 = vstv %s1412
        %v1414 = vmul.f32 %v1413, %v1342
        %v1415 = vmul.f32 %v1413, %v1341
        %v1416 = vmul.f32 %v1413, %v1343
        %v1417 = vadd.f32 %v1409, %v1414
        %v1418 = vadd.f32 %v1410, %v1415
        %v1419 = vadd.f32 %v1411, %v1416
        %s1420 = sld [smem:[#allocation10 + $0x28]]
        %v1421 = vstv %s1420
        %v1422 = vmul.f32 %v1421, %v1333
        %v1423 = vmul.f32 %v1421, %v1332
        %v1424 = vmul.f32 %v1421, %v1334
        %v1425 = vadd.f32 %v1306, %v1422
        %v1426 = vadd.f32 %v1307, %v1423
        %v1427 = vadd.f32 %v1308, %v1424
        %s1428 = sld [smem:[#allocation10 + $0x59]]
        %v1429 = vstv %s1428
        %v1430 = vmul.f32 %v1429, %v1342
        %v1431 = vmul.f32 %v1429, %v1341
        %v1432 = vmul.f32 %v1429, %v1343
        %v1433 = vadd.f32 %v1425, %v1430
        %v1434 = vadd.f32 %v1426, %v1431
        %v1435 = vadd.f32 %v1427, %v1432
        %s1436 = sld [smem:[#allocation10 + $0x29]]
        %v1437 = vstv %s1436
        %v1438 = vmul.f32 %v1437, %v1333
        %v1439 = vmul.f32 %v1437, %v1332
        %v1440 = vmul.f32 %v1437, %v1334
        %v1441 = vadd.f32 %v1322, %v1438
        %v1442 = vadd.f32 %v1323, %v1439
        %v1443 = vadd.f32 %v1324, %v1440
        %s1444 = sld [smem:[#allocation10 + $0x5a]]
        %v1445 = vstv %s1444
        %v1446 = vmul.f32 %v1445, %v1342
        %v1447 = vmul.f32 %v1445, %v1341
        %v1448 = vmul.f32 %v1445, %v1343
        %v1449 = vadd.f32 %v1441, %v1446
        %v1450 = vadd.f32 %v1442, %v1447
        %v1451 = vadd.f32 %v1443, %v1448
        %1452 = vrot.lane.b32.xlu0 %v703, 80
        %v1453 = vpop.permute.xlu0 %1452
        %1454 = vrot.lane.b32.xlu0 %v704, 80
        %v1455 = vpop.permute.xlu0 %1454
        %1456 = vrot.lane.b32.xlu0 %v705, 80
        %v1457 = vpop.permute.xlu0 %1456
        %vm1458 = vcmp.lt.s32.totalorder %v312, 80
        %v1459 = vsel %vm1458, %v1455, %v1457
        %v1460 = vsel %vm1458, %v1453, %v1455
        %v1461 = vsel %vm1458, %v1457, %v1453
        %1462 = vrot.lane.b32.xlu0 %v706, 80
        %v1463 = vpop.permute.xlu0 %1462
        %1464 = vrot.lane.b32.xlu0 %v707, 80
        %v1465 = vpop.permute.xlu0 %1464
        %1466 = vrot.lane.b32.xlu0 %v708, 80
        %v1467 = vpop.permute.xlu0 %1466
        %v1468 = vsel %vm1458, %v1465, %v1467
        %v1469 = vsel %vm1458, %v1463, %v1465
        %v1470 = vsel %vm1458, %v1467, %v1463
        %s1471 = sld [smem:[#allocation10 + $0x2a]]
        %v1472 = vstv %s1471
        %v1473 = vmul.f32 %v1472, %v1460
        %v1474 = vmul.f32 %v1472, %v1459
        %v1475 = vmul.f32 %v1472, %v1461
        %v1476 = vadd.f32 %v1357, %v1473
        %v1477 = vadd.f32 %v1358, %v1474
        %v1478 = vadd.f32 %v1359, %v1475
        %s1479 = sld [smem:[#allocation10 + $0x5b]]
        %v1480 = vstv %s1479
        %v1481 = vmul.f32 %v1480, %v1469
        %v1482 = vmul.f32 %v1480, %v1468
        %v1483 = vmul.f32 %v1480, %v1470
        %v1484 = vadd.f32 %v1476, %v1481
        %v1485 = vadd.f32 %v1477, %v1482
        %v1486 = vadd.f32 %v1478, %v1483
        %s1487 = sld [smem:[#allocation10 + $0x2b]]
        %v1488 = vstv %s1487
        %v1489 = vmul.f32 %v1488, %v1460
        %v1490 = vmul.f32 %v1488, %v1459
        %v1491 = vmul.f32 %v1488, %v1461
        %v1492 = vadd.f32 %v1373, %v1489
        %v1493 = vadd.f32 %v1374, %v1490
        %v1494 = vadd.f32 %v1375, %v1491
        %s1495 = sld [smem:[#allocation10 + $0x5c]]
        %v1496 = vstv %s1495
        %v1497 = vmul.f32 %v1496, %v1469
        %v1498 = vmul.f32 %v1496, %v1468
        %v1499 = vmul.f32 %v1496, %v1470
        %v1500 = vadd.f32 %v1492, %v1497
        %v1501 = vadd.f32 %v1493, %v1498
        %v1502 = vadd.f32 %v1494, %v1499
        %s1503 = sld [smem:[#allocation10 + $0x2c]]
        %v1504 = vstv %s1503
        %v1505 = vmul.f32 %v1504, %v1460
        %v1506 = vmul.f32 %v1504, %v1459
        %v1507 = vmul.f32 %v1504, %v1461
        %v1508 = vadd.f32 %v1389, %v1505
        %v1509 = vadd.f32 %v1390, %v1506
        %v1510 = vadd.f32 %v1391, %v1507
        %s1511 = sld [smem:[#allocation10 + $0x5d]]
        %v1512 = vstv %s1511
        %v1513 = vmul.f32 %v1512, %v1469
        %v1514 = vmul.f32 %v1512, %v1468
        %v1515 = vmul.f32 %v1512, %v1470
        %v1516 = vadd.f32 %v1508, %v1513
        %v1517 = vadd.f32 %v1509, %v1514
        %v1518 = vadd.f32 %v1510, %v1515
        %s1519 = sld [smem:[#allocation10 + $0x2d]]
        %v1520 = vstv %s1519
        %v1521 = vmul.f32 %v1520, %v1460
        %v1522 = vmul.f32 %v1520, %v1459
        %v1523 = vadd.f32 %v1402, %v1521
        %v1524 = vadd.f32 %v1403, %v1522
        %s1525 = sld [smem:[#allocation10 + $0x5e]]
        %v1526 = vstv %s1525
        %v1527 = vmul.f32 %v1526, %v1469
        %v1528 = vmul.f32 %v1526, %v1468
        %v1529 = vadd.f32 %v1523, %v1527
        %v1530 = vadd.f32 %v1524, %v1528
        %s1531 = sld [smem:[#allocation10 + $0x2e]]
        %v1532 = vstv %s1531
        %v1533 = vmul.f32 %v1532, %v1460
        %v1534 = vmul.f32 %v1532, %v1459
        %v1535 = vmul.f32 %v1532, %v1461
        %v1536 = vadd.f32 %v1417, %v1533
        %v1537 = vadd.f32 %v1418, %v1534
        %v1538 = vadd.f32 %v1419, %v1535
        %s1539 = sld [smem:[#allocation10 + $0x5f]]
        %v1540 = vstv %s1539
        %v1541 = vmul.f32 %v1540, %v1469
        %v1542 = vmul.f32 %v1540, %v1468
        %v1543 = vmul.f32 %v1540, %v1470
        %v1544 = vadd.f32 %v1536, %v1541
        %v1545 = vadd.f32 %v1537, %v1542
        %v1546 = vadd.f32 %v1538, %v1543
        %s1547 = sld [smem:[#allocation10 + $0x2f]]
        %v1548 = vstv %s1547
        %v1549 = vmul.f32 %v1548, %v1460
        %v1550 = vmul.f32 %v1548, %v1459
        %v1551 = vmul.f32 %v1548, %v1461
        %v1552 = vadd.f32 %v1433, %v1549
        %v1553 = vadd.f32 %v1434, %v1550
        %v1554 = vadd.f32 %v1435, %v1551
        %s1555 = sld [smem:[#allocation10 + $0x60]]
        %v1556 = vstv %s1555
        %v1557 = vmul.f32 %v1556, %v1469
        %v1558 = vmul.f32 %v1556, %v1468
        %v1559 = vmul.f32 %v1556, %v1470
        %v1560 = vadd.f32 %v1552, %v1557
        %v1561 = vadd.f32 %v1553, %v1558
        %v1562 = vadd.f32 %v1554, %v1559
        %s1563 = sld [smem:[#allocation10 + $0x30]]
        %v1564 = vstv %s1563
        %v1565 = vmul.f32 %v1564, %v1460
        %v1566 = vmul.f32 %v1564, %v1459
        %v1567 = vmul.f32 %v1564, %v1461
        %v1568 = vadd.f32 %v1449, %v1565
        %v1569 = vadd.f32 %v1450, %v1566
        %v1570 = vadd.f32 %v1451, %v1567
        %s1571 = sld [smem:[#allocation10 + $0x61]]
        %v1572 = vstv %s1571
        %v1573 = vmul.f32 %v1572, %v1469
        %v1574 = vmul.f32 %v1572, %v1468
        %v1575 = vmul.f32 %v1572, %v1470
        %v1576 = vadd.f32 %v1568, %v1573
        %v1577 = vadd.f32 %v1569, %v1574
        %v1578 = vadd.f32 %v1570, %v1575
        %1579 = vrot.lane.b32.xlu0 %v1484, 3
        %v1580 = vpop.permute.xlu0 %1579
        %1581 = vrot.lane.b32.xlu0 %v1485, 3
        %v1582 = vpop.permute.xlu0 %1581
        %1583 = vrot.lane.b32.xlu0 %v1486, 3
        %v1584 = vpop.permute.xlu0 %1583
        %vm1585 = vcmp.lt.s32.totalorder %v312, 3
        %v1586 = vsel %vm1585, %v1580, %v1582
        %v1587 = vsel %vm1585, %v1584, %v1580
        %v1588 = vld [vmem:[#allocation8] ss:$8 sm:$0x7]
        %v1590 = vlaneseq
        %v1591 = vshrl.u32 %v1590, 7
        %v1592 = vsub.s32 0, %v1591
        %v1593 = vrot.slane %v1588, %v1592
        %v1594 = vlaneseq
        %v1595 = vshrl.u32 %v1594, 7
        %v1596 = vsub.s32 1, %v1595
        %v1597 = vrot.slane %v1588, %v1596
        %v1600 = vmul.f32 %v1593, %v1587
        %v1601 = vmul.f32 %v1597, %v1586
        %v1602 = vadd.f32 %v1600, 0.0
        %v1603 = vadd.f32 %v1601, 0.0
        %1604 = vrot.lane.b32.xlu0 %v1500, 2
        %v1605 = vpop.permute.xlu0 %1604
        %1606 = vrot.lane.b32.xlu0 %v1501, 2
        %v1607 = vpop.permute.xlu0 %1606
        %1608 = vrot.lane.b32.xlu0 %v1502, 2
        %v1609 = vpop.permute.xlu0 %1608
        %vm1610 = vcmp.lt.s32.totalorder %v312, 2
        %v1611 = vsel %vm1610, %v1605, %v1607
        %v1612 = vsel %vm1610, %v1609, %v1605
        %s1613 = scalar_lea.vmem [#allocation8], 1
        %v1614 = vld [vmem:[%s1613] ss:$8 sm:$0x7]
        %v1616 = vlaneseq
        %v1617 = vshrl.u32 %v1616, 7
        %v1618 = vsub.s32 0, %v1617
        %v1619 = vrot.slane %v1614, %v1618
        %v1620 = vlaneseq
        %v1621 = vshrl.u32 %v1620, 7
        %v1622 = vsub.s32 1, %v1621
        %v1623 = vrot.slane %v1614, %v1622
        %v1626 = vmul.f32 %v1619, %v1612
        %v1627 = vmul.f32 %v1623, %v1611
        %v1628 = vadd.f32 %v1602, %v1626
        %v1629 = vadd.f32 %v1603, %v1627
        %1630 = vrot.lane.b32.xlu0 %v1516, 1
        %v1631 = vpop.permute.xlu0 %1630
        %1632 = vrot.lane.b32.xlu0 %v1517, 1
        %v1633 = vpop.permute.xlu0 %1632
        %1634 = vrot.lane.b32.xlu0 %v1518, 1
        %v1635 = vpop.permute.xlu0 %1634
        %vm1636 = vcmp.lt.s32.totalorder %v312, 1
        %v1637 = vsel %vm1636, %v1631, %v1633
        %v1638 = vsel %vm1636, %v1635, %v1631
        %s1639 = scalar_lea.vmem [#allocation8], 2
        %v1640 = vld [vmem:[%s1639] ss:$8 sm:$0x7]
        %v1642 = vlaneseq
        %v1643 = vshrl.u32 %v1642, 7
        %v1644 = vsub.s32 0, %v1643
        %v1645 = vrot.slane %v1640, %v1644
        %v1646 = vlaneseq
        %v1647 = vshrl.u32 %v1646, 7
        %v1648 = vsub.s32 1, %v1647
        %v1649 = vrot.slane %v1640, %v1648
        %v1652 = vmul.f32 %v1645, %v1638
        %v1653 = vmul.f32 %v1649, %v1637
        %v1654 = vadd.f32 %v1628, %v1652
        %v1655 = vadd.f32 %v1629, %v1653
        %s1656 = scalar_lea.vmem [#allocation8], 3
        %v1657 = vld [vmem:[%s1656] ss:$8 sm:$0x7]
        %v1659 = vlaneseq
        %v1660 = vshrl.u32 %v1659, 7
        %v1661 = vsub.s32 0, %v1660
        %v1662 = vrot.slane %v1657, %v1661
        %v1663 = vlaneseq
        %v1664 = vshrl.u32 %v1663, 7
        %v1665 = vsub.s32 1, %v1664
        %v1666 = vrot.slane %v1657, %v1665
        %v1669 = vmul.f32 %v1662, %v1529
        %v1670 = vmul.f32 %v1666, %v1530
        %v1671 = vadd.f32 %v1654, %v1669
        %v1672 = vadd.f32 %v1655, %v1670
        %1673 = vrot.lane.b32.xlu0 %v1544, 127
        %v1674 = vpop.permute.xlu0 %1673
        %1675 = vrot.lane.b32.xlu0 %v1545, 127
        %v1676 = vpop.permute.xlu0 %1675
        %1677 = vrot.lane.b32.xlu0 %v1546, 127
        %v1678 = vpop.permute.xlu0 %1677
        %vm1679 = vcmp.lt.s32.totalorder %v312, 127
        %v1680 = vsel %vm1679, %v1676, %v1678
        %v1681 = vsel %vm1679, %v1674, %v1676
        %s1682 = scalar_lea.vmem [#allocation8], 4
        %v1683 = vld [vmem:[%s1682] ss:$8 sm:$0x7]
        %v1685 = vlaneseq
        %v1686 = vshrl.u32 %v1685, 7
        %v1687 = vsub.s32 0, %v1686
        %v1688 = vrot.slane %v1683, %v1687
        %v1689 = vlaneseq
        %v1690 = vshrl.u32 %v1689, 7
        %v1691 = vsub.s32 1, %v1690
        %v1692 = vrot.slane %v1683, %v1691
        %v1695 = vmul.f32 %v1688, %v1681
        %v1696 = vmul.f32 %v1692, %v1680
        %v1697 = vadd.f32 %v1671, %v1695
        %v1698 = vadd.f32 %v1672, %v1696
        %1699 = vrot.lane.b32.xlu0 %v1560, 126
        %v1700 = vpop.permute.xlu0 %1699
        %1701 = vrot.lane.b32.xlu0 %v1561, 126
        %v1702 = vpop.permute.xlu0 %1701
        %1703 = vrot.lane.b32.xlu0 %v1562, 126
        %v1704 = vpop.permute.xlu0 %1703
        %vm1705 = vcmp.lt.s32.totalorder %v312, 126
        %v1706 = vsel %vm1705, %v1702, %v1704
        %v1707 = vsel %vm1705, %v1700, %v1702
        %s1708 = scalar_lea.vmem [#allocation8], 5
        %v1709 = vld [vmem:[%s1708] ss:$8 sm:$0x7]
        %v1711 = vlaneseq
        %v1712 = vshrl.u32 %v1711, 7
        %v1713 = vsub.s32 0, %v1712
        %v1714 = vrot.slane %v1709, %v1713
        %v1715 = vlaneseq
        %v1716 = vshrl.u32 %v1715, 7
        %v1717 = vsub.s32 1, %v1716
        %v1718 = vrot.slane %v1709, %v1717
        %v1721 = vmul.f32 %v1714, %v1707
        %v1722 = vmul.f32 %v1718, %v1706
        %v1723 = vadd.f32 %v1697, %v1721
        %v1724 = vadd.f32 %v1698, %v1722
        %1725 = vrot.lane.b32.xlu0 %v1576, 125
        %v1726 = vpop.permute.xlu0 %1725
        %1727 = vrot.lane.b32.xlu0 %v1577, 125
        %v1728 = vpop.permute.xlu0 %1727
        %1729 = vrot.lane.b32.xlu0 %v1578, 125
        %v1730 = vpop.permute.xlu0 %1729
        %vm1731 = vcmp.lt.s32.totalorder %v312, 125
        %v1732 = vsel %vm1731, %v1728, %v1730
        %v1733 = vsel %vm1731, %v1726, %v1728
        %s1734 = scalar_lea.vmem [#allocation8], 6
        %v1735 = vld [vmem:[%s1734] ss:$8 sm:$0x7]
        %v1737 = vlaneseq
        %v1738 = vshrl.u32 %v1737, 7
        %v1739 = vsub.s32 0, %v1738
        %v1740 = vrot.slane %v1735, %v1739
        %v1741 = vlaneseq
        %v1742 = vshrl.u32 %v1741, 7
        %v1743 = vsub.s32 1, %v1742
        %v1744 = vrot.slane %v1735, %v1743
        %v1747 = vmul.f32 %v1740, %v1733
        %v1748 = vmul.f32 %v1744, %v1732
        %v1749 = vadd.f32 %v1723, %v1747
        %v1750 = vadd.f32 %v1724, %v1748
        %v1751 = vxor.u32 %v1749, 2147483648
        %v1752 = vxor.u32 %v1750, 2147483648
        %v1753 = vmul.f32 %v1751, 1.442695
        %v1754 = vpow.pop %v1753
        %v1755 = vmul.f32 %v1752, 1.442695
        %v1756 = vpow.pop %v1755
        %v1757 = vadd.f32 %v1754, 1.0
        %v1758 = vadd.f32 %v1756, 1.0
        %v1759 = vrcp.pop %v1757
        %v1760 = vmul.f32 1.0, %v1759
        %v1761 = vrcp.pop %v1758
        %v1762 = vmul.f32 1.0, %v1761
        %v1763 = vld [vmem:[%s270] sm:$0xff]
        %v1764 = vld [vmem:[%s270 + $0x8] sm:$0xff]
        %v1765 = vld [vmem:[%s270 + $0x10] sm:$0xff]
        %v1766 = vld [vmem:[%s270 + $0x18] sm:$0xff]
        %v1767 = vlaneseq
        %v1768 = vshrl.u32 %v1767, 7
        %v1769 = vsub.s32 0, %v1768
        %v1770 = vrot.slane %v1760, %v1769
        %v1771 = vlaneseq
        %v1772 = vshrl.u32 %v1771, 7
        %v1773 = vsub.s32 0, %v1772
        %v1774 = vrot.slane %v1762, %v1773
        %v1775 = vmul.f32 %v1763, %v1770
        %v1776 = vmul.f32 %v1764, %v1774
        %v1777 = vmul.f32 %v1765, %v1770
        %v1778 = vmul.f32 %v1766, %v1774
        %1779 = vst [vmem:[%s270] sm:$0xff] %v1775
        %1780 = vst [vmem:[%s270 + $0x8] sm:$0xff] %v1776
        %1781 = vst [vmem:[%s270 + $0x10] sm:$0xff] %v1777
        %1782 = vst [vmem:[%s270 + $0x18] sm:$0xff] %v1778
        %v1783 = vld [vmem:[%s626] sm:$0xff]
        %v1784 = vld [vmem:[%s626 + $0x8] sm:$0xff]
        %v1785 = vld [vmem:[%s626 + $0x10] sm:$0xff]
        %v1786 = vld [vmem:[%s626 + $0x18] sm:$0xff]
        %v1787 = vlaneseq
        %v1788 = vshrl.u32 %v1787, 7
        %v1789 = vsub.s32 1, %v1788
        %v1790 = vrot.slane %v1760, %v1789
        %v1791 = vlaneseq
        %v1792 = vshrl.u32 %v1791, 7
        %v1793 = vsub.s32 1, %v1792
        %v1794 = vrot.slane %v1762, %v1793
        %v1795 = vmul.f32 %v1783, %v1790
        %v1796 = vmul.f32 %v1784, %v1794
        %v1797 = vmul.f32 %v1785, %v1790
        %v1798 = vmul.f32 %v1786, %v1794
        %1799 = vst [vmem:[%s626] sm:$0xff] %v1795
        %1800 = vst [vmem:[%s626 + $0x8] sm:$0xff] %v1796
        %1801 = vst [vmem:[%s626 + $0x10] sm:$0xff] %v1797
        %1802 = vst [vmem:[%s626 + $0x18] sm:$0xff] %v1798
        %s1803 = sand.u32 %s142, 1
        %s1804 = scalar_lea.sflag [#allocation6], %s1803
        %s1805 = sand.u32 %s142, 1
        %s1806 = smul.addr %s1805, 64
        %s1807 = scalar_lea.vmem [#allocation11], %s1806
        // Predicated region
        $region53: #{tpu_custom_call.1} parent=39 // pred_check
          %p1808 = pneg %p152
        $region54: #{tpu_custom_call.1} parent=39 // pred_check_branch
          %1810 = sbr.rel (%p1808) target = $region56
        $region55: #{tpu_custom_call.1} parent=39 // pred_region
          %s1811 = smul.u32 2, %s24
          %s1813 = ssub.s32 1024, 1024
          %1814 = vsyncadd %s1804, %s1813
          %s1815 = smul.addr %s1811, 4
          %s1816 = smul.addr %s1815, 128
          %s1817 = scalar_lea.hbm %s5, %s1816
          %s1818 = sshll.u32 %s1807, 4
          %s1819 = int_to_ptr.vmem [resolvable:$true] %s1818
          %1824 = dma.vmem_to_hbm [thread:$0]  %s1819, 1024, %s1817, %s1804, 256, 256, 16
        $region56: #{tpu_custom_call.1} parent=39 // pred_fallthru
          _
      $region40: #{tpu_custom_call.1} parent=5 // pred_fallthru
        _
      %p1825 = scmp.le.s32.totalorder 2, %s19
      // Predicated region
      $region57: #{tpu_custom_call.1} parent=5 // pred_check
        %p1826 = pneg %p1825
      $region58: #{tpu_custom_call.1} parent=5 // pred_check_branch
        %1828 = sbr.rel (%p1826) target = $region60
      $region59: #{tpu_custom_call.1} parent=5 // pred_region
        %s1829 = ssub.s32 %s19, 2
        // Predicated region
        $region61: #{tpu_custom_call.1} parent=59 // pred_check
          %p1830 = pneg %p158
        $region62: #{tpu_custom_call.1} parent=59 // pred_check_branch
          %1832 = sbr.rel (%p1830) target = $region64
        $region63: #{tpu_custom_call.1} parent=59 // pred_region
          %s1833 = sand.u32 %s143, 1
          %s1834 = scalar_lea.sflag [#allocation6], %s1833
          %s1835 = sand.u32 %s143, 1
          %s1836 = smul.addr %s1835, 64
          %s1837 = scalar_lea.vmem [#allocation11], %s1836
          %1838 = dma.done %s1834, 1024
        $region64: #{tpu_custom_call.1} parent=59 // pred_fallthru
          _
      $region60: #{tpu_custom_call.1} parent=5 // pred_fallthru
        _
    $region6: #{tpu_custom_call.1} parent=1 // loop_footer
      %s23 = sadd.s32 1, %s19
    $region7: #{tpu_custom_call.1} parent=1 // loop_footer_branch
      %18 = sbr.rel target = $region3
    $region8: #{tpu_custom_call.1} parent=1 // loop_exit
      _
    %1839 = vsyncpa [#allocation5], 1
    %s1840 = scalar_lea.sflag [#allocation5], 1
    %1841 = vsyncpa %s1840, 1
    %1842 = vsyncpa [#allocation9], 1
    %1843 = vsyncpa [#allocation6], 1
    %s1844 = scalar_lea.sflag [#allocation6], 1
    %1845 = vsyncpa %s1844, 1
    %1846 = vsyncpa [#allocation7], 1
    %s1847 = scalar_lea.sflag [#allocation7], 1
    %1848 = vsyncpa %s1847, 1

</llo_original>
